<compile_context>
chip_gen: v7x
topology: tpu7x:2x2x1
jax: 0.10.0
libtpu: 0.0.40
codegen_flags: <defaults>
</compile_context>

<pallas_src>
import jax
import jax.numpy as jnp
from jax.experimental import pallas as pl
from jax.experimental.pallas import tpu as pltpu

_LANE = 128     # lane width of a vreg (last dim)
_SUBLANE = 8    # f32 sublane granularity (second-to-last dim)


def _round_up(x, m):
    return (x + m - 1) // m * m


def _mlp_kernel(*refs):
    """refs = (x_ref, w0, b0, w1, b1, ..., wL, bL, out_ref).

    One batch tile per grid step; all (padded) layers fused in VMEM.
    Matmuls: MXU, bf16 inputs, f32 accumulation.  Bias + ReLU: VPU, f32.
    Dropout(p=0.5) before the last Linear is eval-mode identity.
    """
    x_ref, out_ref = refs[0], refs[-1]
    param_refs = refs[1:-1]
    n_layers = len(param_refs) // 2

    h = x_ref[...]                                    # (B_tile, in_pad) f32
    for i in range(n_layers):
        w = param_refs[2 * i][...]                    # (in_pad, out_pad) bf16
        b = param_refs[2 * i + 1][...]                # (1, out_pad)      f32
        h = jnp.dot(h.astype(w.dtype), w,
                    preferred_element_type=jnp.float32) + b
        if i < n_layers - 1:                          # ReLU after hidden layers
            h = jnp.maximum(h, 0.0)
        # Dropout(p=0.5) before the final Linear: identity in eval mode.
    out_ref[...] = h.astype(out_ref.dtype)


def model_f_forward(x, params, *, block_b=256):
    """Run the fused MLP.

    x: (B, channels[0]) float32.
    params: list of (W_t, b) with W_t shape (in, out), b shape (1, out) or (out,).
    Returns (B, 10) float32.
    """
    B, c0 = x.shape
    out_dim = params[-1][0].shape[1]

    # ---- zero-pad every feature dim to a full 128-lane tile (exact) ----------
    dims = [c0] + [w.shape[1] for (w, _) in params]
    dims_pad = [_round_up(d, _LANE) for d in dims]

    padded = []
    param_bytes = 0
    for i, (w, b) in enumerate(params):
        in_p, out_p = dims_pad[i], dims_pad[i + 1]
        wp = jnp.zeros((in_p, out_p), jnp.bfloat16)
        wp = wp.at[: w.shape[0], : w.shape[1]].set(w.astype(jnp.bfloat16))
        b2 = jnp.reshape(b, (1, -1)).astype(jnp.float32)
        bp = jnp.zeros((1, out_p), jnp.float32).at[:, : b2.shape[1]].set(b2)
        padded.append((wp, bp))
        param_bytes += wp.size * wp.dtype.itemsize + bp.size * bp.dtype.itemsize

    # ---- batch tiling: multiple of 8 sublanes, prefer >=2 grid steps ---------
    B_tile = max(_SUBLANE, _round_up(min(block_b, max(B, 1)), _SUBLANE))
    if pl.cdiv(_round_up(B, _SUBLANE), B_tile) < 2 and B >= 2 * _SUBLANE:
        # Split the batch so dimension_semantics=("parallel",) can shard across
        # both TensorCores on v7x and keep the input/output pipeline busy.
        B_tile = _round_up(pl.cdiv(B, 2), _SUBLANE)
    B_pad = _round_up(B, B_tile)
    n_blocks = B_pad // B_tile

    in_p0, out_p = dims_pad[0], dims_pad[-1]
    x_pad = jnp.zeros((B_pad, in_p0), jnp.float32).at[:B, :c0].set(
        x.astype(jnp.float32))

    flat_params = []
    for (wp, bp) in padded:
        flat_params.extend([wp, bp])

    # VMEM budget: params (ideally single-buffered) + double-buffered x/out
    # tiles, with headroom; capped well below the v7x 64 MiB physical limit.
    act_bytes = 2 * (B_tile * in_p0 + B_tile * out_p) * 4
    vmem_limit = int(min(56 * 1024 * 1024,
                         max(32 * 1024 * 1024, 2 * (param_bytes + act_bytes))))

    def _call(param_pipeline_mode):
        in_specs = [pl.BlockSpec((B_tile, in_p0), lambda i: (i, 0))]
        for (wp, bp) in padded:
            kw = {}
            if param_pipeline_mode is not None:
                kw = {"pipeline_mode": param_pipeline_mode}
            # Grid-invariant parameters: whole-array block, constant index_map
            # -> fetched once and kept resident across the batch grid.
            in_specs.append(pl.BlockSpec(wp.shape, lambda i: (0, 0), **kw))
            in_specs.append(pl.BlockSpec(bp.shape, lambda i: (0, 0), **kw))
        return pl.pallas_call(
            _mlp_kernel,
            out_shape=jax.ShapeDtypeStruct((B_pad, out_p), jnp.float32),
            grid=(n_blocks,),
            in_specs=in_specs,
            out_specs=pl.BlockSpec((B_tile, out_p), lambda i: (i, 0)),
            compiler_params=pltpu.CompilerParams(
                dimension_semantics=("parallel",),
                vmem_limit_bytes=vmem_limit),
        )(x_pad, *flat_params)

    try:
        # Single-buffer the grid-invariant weights/biases (halves their VMEM).
        out_pad = _call(pl.Buffered(1))
    except Exception:
        # Fallback: default double buffering (still correct, slightly more VMEM).
        out_pad = _call(None)

    return out_pad[:B, :out_dim]


def init_params(key, channels, out_dim=10):
    """Deterministic init matching the PyTorch module's layer shapes.
    nn.Linear(in, out): W (out, in), b (out,)  -> stored transposed (in, out)."""
    dims = list(channels) + [out_dim]
    params = []
    for fan_in, fan_out in zip(dims[:-1], dims[1:]):
        key, kw, kb = jax.random.split(key, 3)
        bound = 1.0 / jnp.sqrt(jnp.float32(fan_in))
        w = jax.random.uniform(kw, (fan_in, fan_out), jnp.float32, -bound, bound)
        b = jax.random.uniform(kb, (1, fan_out), jnp.float32, -bound, bound)
        params.append((w, b))
    return params


def reference_forward(x, params):
    """Pure-JAX reference mirroring the kernel's numerics:
    bf16 matmul inputs, f32 accumulation, f32 bias/ReLU, eval-mode dropout."""
    h = x.astype(jnp.float32)
    for i, (w, b) in enumerate(params):
        h = jnp.dot(h.astype(jnp.bfloat16), w.astype(jnp.bfloat16),
                    preferred_element_type=jnp.float32) + jnp.reshape(b, (1, -1))
        if i < len(params) - 1:
            h = jnp.maximum(h, 0.0)
    return h


if __name__ == "__main__":
    key = jax.random.PRNGKey(0)
    channels = [32, 64, 32]     # Linear(32,64)+ReLU, Linear(64,32)+ReLU,
                                # Dropout(0.5), Linear(32,10)
    batch = 64                  # small, but enough for a 2-step (megacore) grid

    key, kx, kp = jax.random.split(key, 3)
    x = jax.random.normal(kx, (batch, channels[0]), jnp.float32)
    params = init_params(kp, channels, out_dim=10)

    out = model_f_forward(x, params)          # wrapper picks B_tile=32, grid=(2,)
    out = jax.block_until_ready(out)

    ref = reference_forward(x, params)
    assert out.shape == (batch, 10), out.shape
    max_err = float(jnp.max(jnp.abs(out - ref)))
    assert max_err < 1e-2, max_err
    print("KERNEL_OK")
</pallas_src>

<mosaic_0001>
module attributes {stable_mosaic.version = 11 : i64} {
  func.func @_mlp_kernel(%arg0: i32, %arg1: memref<32x128xf32, #tpu.memory_space<vmem>>, %arg2: memref<128x128xbf16, #tpu.memory_space<vmem>>, %arg3: memref<1x128xf32, #tpu.memory_space<vmem>>, %arg4: memref<128x128xbf16, #tpu.memory_space<vmem>>, %arg5: memref<1x128xf32, #tpu.memory_space<vmem>>, %arg6: memref<128x128xbf16, #tpu.memory_space<vmem>>, %arg7: memref<1x128xf32, #tpu.memory_space<vmem>>, %arg8: memref<32x128xf32, #tpu.memory_space<vmem>>) attributes {dimension_semantics = [#tpu.dimension_semantics<parallel>], iteration_bounds = array<i64: 2>, scalar_prefetch = 0 : i64, scratch_operands = 0 : i64, tpu.core_type = #tpu.core_type<tc>, window_params = [{transform_indices = @transform_0, window_bounds = array<i64: 32, 128>}, {pipeline_mode = #tpu.pipeline_mode<synchronous>, transform_indices = @transform_1, window_bounds = array<i64: 128, 128>}, {pipeline_mode = #tpu.pipeline_mode<synchronous>, transform_indices = @transform_2, window_bounds = array<i64: 1, 128>}, {pipeline_mode = #tpu.pipeline_mode<synchronous>, transform_indices = @transform_3, window_bounds = array<i64: 128, 128>}, {pipeline_mode = #tpu.pipeline_mode<synchronous>, transform_indices = @transform_4, window_bounds = array<i64: 1, 128>}, {pipeline_mode = #tpu.pipeline_mode<synchronous>, transform_indices = @transform_5, window_bounds = array<i64: 128, 128>}, {pipeline_mode = #tpu.pipeline_mode<synchronous>, transform_indices = @transform_6, window_bounds = array<i64: 1, 128>}, {transform_indices = @transform_7, window_bounds = array<i64: 32, 128>}]} {
    %c0 = arith.constant 0 : index
    %c0_0 = arith.constant 0 : index
    %0 = vector.load %arg1[%c0, %c0_0] : memref<32x128xf32, #tpu.memory_space<vmem>>, vector<32x128xf32>
    %c0_1 = arith.constant 0 : index
    %c0_2 = arith.constant 0 : index
    %1 = vector.load %arg2[%c0_1, %c0_2] : memref<128x128xbf16, #tpu.memory_space<vmem>>, vector<128x128xbf16>
    %c0_3 = arith.constant 0 : index
    %c0_4 = arith.constant 0 : index
    %2 = vector.load %arg3[%c0_3, %c0_4] : memref<1x128xf32, #tpu.memory_space<vmem>>, vector<1x128xf32>
    %3 = arith.truncf %0 : vector<32x128xf32> to vector<32x128xbf16>
    %cst = arith.constant dense<0.000000e+00> : vector<32x128xf32>
    %4 = tpu.matmul %3, %1, %cst {dimension_numbers = #tpu.dot_dimension_numbers<[1], [0], [0], [1], [0, 0, 1, 1], [], []>} : vector<32x128xbf16>, vector<128x128xbf16>, vector<32x128xf32> -> vector<32x128xf32>
    %5 = vector.broadcast %2 : vector<1x128xf32> to vector<32x128xf32>
    %6 = arith.addf %4, %5 : vector<32x128xf32>
    %cst_5 = arith.constant 0.000000e+00 : f32
    %7 = vector.broadcast %cst_5 : f32 to vector<32x128xf32>
    %8 = arith.maximumf %6, %7 : vector<32x128xf32>
    %c0_6 = arith.constant 0 : index
    %c0_7 = arith.constant 0 : index
    %9 = vector.load %arg4[%c0_6, %c0_7] : memref<128x128xbf16, #tpu.memory_space<vmem>>, vector<128x128xbf16>
    %c0_8 = arith.constant 0 : index
    %c0_9 = arith.constant 0 : index
    %10 = vector.load %arg5[%c0_8, %c0_9] : memref<1x128xf32, #tpu.memory_space<vmem>>, vector<1x128xf32>
    %11 = arith.truncf %8 : vector<32x128xf32> to vector<32x128xbf16>
    %cst_10 = arith.constant dense<0.000000e+00> : vector<32x128xf32>
    %12 = tpu.matmul %11, %9, %cst_10 {dimension_numbers = #tpu.dot_dimension_numbers<[1], [0], [0], [1], [0, 0, 1, 1], [], []>} : vector<32x128xbf16>, vector<128x128xbf16>, vector<32x128xf32> -> vector<32x128xf32>
    %13 = vector.broadcast %10 : vector<1x128xf32> to vector<32x128xf32>
    %14 = arith.addf %12, %13 : vector<32x128xf32>
    %cst_11 = arith.constant 0.000000e+00 : f32
    %15 = vector.broadcast %cst_11 : f32 to vector<32x128xf32>
    %16 = arith.maximumf %14, %15 : vector<32x128xf32>
    %c0_12 = arith.constant 0 : index
    %c0_13 = arith.constant 0 : index
    %17 = vector.load %arg6[%c0_12, %c0_13] : memref<128x128xbf16, #tpu.memory_space<vmem>>, vector<128x128xbf16>
    %c0_14 = arith.constant 0 : index
    %c0_15 = arith.constant 0 : index
    %18 = vector.load %arg7[%c0_14, %c0_15] : memref<1x128xf32, #tpu.memory_space<vmem>>, vector<1x128xf32>
    %19 = arith.truncf %16 : vector<32x128xf32> to vector<32x128xbf16>
    %cst_16 = arith.constant dense<0.000000e+00> : vector<32x128xf32>
    %20 = tpu.matmul %19, %17, %cst_16 {dimension_numbers = #tpu.dot_dimension_numbers<[1], [0], [0], [1], [0, 0, 1, 1], [], []>} : vector<32x128xbf16>, vector<128x128xbf16>, vector<32x128xf32> -> vector<32x128xf32>
    %21 = vector.broadcast %18 : vector<1x128xf32> to vector<32x128xf32>
    %22 = arith.addf %20, %21 : vector<32x128xf32>
    %c0_17 = arith.constant 0 : index
    %c0_18 = arith.constant 0 : index
    %23 = vector.load %arg8[%c0_17, %c0_18] : memref<32x128xf32, #tpu.memory_space<vmem>>, vector<32x128xf32>
    tpu.vector_store %arg8[%c0_17, %c0_18], %22 {strides = array<i32>} : memref<32x128xf32, #tpu.memory_space<vmem>>, vector<32x128xf32>,
    return
  }
  func.func @transform_0(%arg0: i32) -> (i32, i32) {
    %c0_i32 = arith.constant 0 : i32
    %c0_i32_0 = arith.constant 0 : i32
    return %arg0, %c0_i32 : i32, i32
  }
  func.func @transform_1(%arg0: i32) -> (i32, i32) {
    %c0_i32 = arith.constant 0 : i32
    %c0_i32_0 = arith.constant 0 : i32
    %c0_i32_1 = arith.constant 0 : i32
    return %c0_i32, %c0_i32_0 : i32, i32
  }
  func.func @transform_2(%arg0: i32) -> (i32, i32) {
    %c0_i32 = arith.constant 0 : i32
    %c0_i32_0 = arith.constant 0 : i32
    %c0_i32_1 = arith.constant 0 : i32
    return %c0_i32, %c0_i32_0 : i32, i32
  }
  func.func @transform_3(%arg0: i32) -> (i32, i32) {
    %c0_i32 = arith.constant 0 : i32
    %c0_i32_0 = arith.constant 0 : i32
    %c0_i32_1 = arith.constant 0 : i32
    return %c0_i32, %c0_i32_0 : i32, i32
  }
  func.func @transform_4(%arg0: i32) -> (i32, i32) {
    %c0_i32 = arith.constant 0 : i32
    %c0_i32_0 = arith.constant 0 : i32
    %c0_i32_1 = arith.constant 0 : i32
    return %c0_i32, %c0_i32_0 : i32, i32
  }
  func.func @transform_5(%arg0: i32) -> (i32, i32) {
    %c0_i32 = arith.constant 0 : i32
    %c0_i32_0 = arith.constant 0 : i32
    %c0_i32_1 = arith.constant 0 : i32
    return %c0_i32, %c0_i32_0 : i32, i32
  }
  func.func @transform_6(%arg0: i32) -> (i32, i32) {
    %c0_i32 = arith.constant 0 : i32
    %c0_i32_0 = arith.constant 0 : i32
    %c0_i32_1 = arith.constant 0 : i32
    return %c0_i32, %c0_i32_0 : i32, i32
  }
  func.func @transform_7(%arg0: i32) -> (i32, i32) {
    %c0_i32 = arith.constant 0 : i32
    %c0_i32_0 = arith.constant 0 : i32
    return %arg0, %c0_i32 : i32, i32
  }
}

module attributes {stable_mosaic.version = 11 : i64} {
  func.func @_mlp_kernel(%arg0: i32, %arg1: memref<32x128xf32, #tpu.memory_space<vmem>>, %arg2: memref<128x128xbf16, #tpu.memory_space<vmem>>, %arg3: memref<1x128xf32, #tpu.memory_space<vmem>>, %arg4: memref<128x128xbf16, #tpu.memory_space<vmem>>, %arg5: memref<1x128xf32, #tpu.memory_space<vmem>>, %arg6: memref<128x128xbf16, #tpu.memory_space<vmem>>, %arg7: memref<1x128xf32, #tpu.memory_space<vmem>>, %arg8: memref<32x128xf32, #tpu.memory_space<vmem>>) attributes {dimension_semantics = [#tpu.dimension_semantics<parallel>], iteration_bounds = array<i64: 2>, scalar_prefetch = 0 : i64, scratch_operands = 0 : i64, tpu.core_type = #tpu.core_type<tc>, window_params = [{transform_indices = @transform_0, window_bounds = array<i64: 32, 128>}, {pipeline_mode = #tpu.pipeline_mode<synchronous>, transform_indices = @transform_1, window_bounds = array<i64: 128, 128>}, {pipeline_mode = #tpu.pipeline_mode<synchronous>, transform_indices = @transform_2, window_bounds = array<i64: 1, 128>}, {pipeline_mode = #tpu.pipeline_mode<synchronous>, transform_indices = @transform_3, window_bounds = array<i64: 128, 128>}, {pipeline_mode = #tpu.pipeline_mode<synchronous>, transform_indices = @transform_4, window_bounds = array<i64: 1, 128>}, {pipeline_mode = #tpu.pipeline_mode<synchronous>, transform_indices = @transform_5, window_bounds = array<i64: 128, 128>}, {pipeline_mode = #tpu.pipeline_mode<synchronous>, transform_indices = @transform_6, window_bounds = array<i64: 1, 128>}, {transform_indices = @transform_7, window_bounds = array<i64: 32, 128>}]} {
    %c0 = arith.constant 0 : index
    %c0_0 = arith.constant 0 : index
    %0 = vector.load %arg1[%c0, %c0_0] : memref<32x128xf32, #tpu.memory_space<vmem>>, vector<32x128xf32>
    %c0_1 = arith.constant 0 : index
    %c0_2 = arith.constant 0 : index
    %1 = vector.load %arg2[%c0_1, %c0_2] : memref<128x128xbf16, #tpu.memory_space<vmem>>, vector<128x128xbf16>
    %c0_3 = arith.constant 0 : index
    %c0_4 = arith.constant 0 : index
    %2 = vector.load %arg3[%c0_3, %c0_4] : memref<1x128xf32, #tpu.memory_space<vmem>>, vector<1x128xf32>
    %3 = arith.truncf %0 : vector<32x128xf32> to vector<32x128xbf16>
    %cst = arith.constant dense<0.000000e+00> : vector<32x128xf32>
    %4 = tpu.matmul %3, %1, %cst {dimension_numbers = #tpu.dot_dimension_numbers<[1], [0], [0], [1], [0, 0, 1, 1], [], []>} : vector<32x128xbf16>, vector<128x128xbf16>, vector<32x128xf32> -> vector<32x128xf32>
    %5 = vector.broadcast %2 : vector<1x128xf32> to vector<32x128xf32>
    %6 = arith.addf %4, %5 : vector<32x128xf32>
    %cst_5 = arith.constant 0.000000e+00 : f32
    %7 = vector.broadcast %cst_5 : f32 to vector<32x128xf32>
    %8 = arith.maximumf %6, %7 : vector<32x128xf32>
    %c0_6 = arith.constant 0 : index
    %c0_7 = arith.constant 0 : index
    %9 = vector.load %arg4[%c0_6, %c0_7] : memref<128x128xbf16, #tpu.memory_space<vmem>>, vector<128x128xbf16>
    %c0_8 = arith.constant 0 : index
    %c0_9 = arith.constant 0 : index
    %10 = vector.load %arg5[%c0_8, %c0_9] : memref<1x128xf32, #tpu.memory_space<vmem>>, vector<1x128xf32>
    %11 = arith.truncf %8 : vector<32x128xf32> to vector<32x128xbf16>
    %cst_10 = arith.constant dense<0.000000e+00> : vector<32x128xf32>
    %12 = tpu.matmul %11, %9, %cst_10 {dimension_numbers = #tpu.dot_dimension_numbers<[1], [0], [0], [1], [0, 0, 1, 1], [], []>} : vector<32x128xbf16>, vector<128x128xbf16>, vector<32x128xf32> -> vector<32x128xf32>
    %13 = vector.broadcast %10 : vector<1x128xf32> to vector<32x128xf32>
    %14 = arith.addf %12, %13 : vector<32x128xf32>
    %cst_11 = arith.constant 0.000000e+00 : f32
    %15 = vector.broadcast %cst_11 : f32 to vector<32x128xf32>
    %16 = arith.maximumf %14, %15 : vector<32x128xf32>
    %c0_12 = arith.constant 0 : index
    %c0_13 = arith.constant 0 : index
    %17 = vector.load %arg6[%c0_12, %c0_13] : memref<128x128xbf16, #tpu.memory_space<vmem>>, vector<128x128xbf16>
    %c0_14 = arith.constant 0 : index
    %c0_15 = arith.constant 0 : index
    %18 = vector.load %arg7[%c0_14, %c0_15] : memref<1x128xf32, #tpu.memory_space<vmem>>, vector<1x128xf32>
    %19 = arith.truncf %16 : vector<32x128xf32> to vector<32x128xbf16>
    %cst_16 = arith.constant dense<0.000000e+00> : vector<32x128xf32>
    %20 = tpu.matmul %19, %17, %cst_16 {dimension_numbers = #tpu.dot_dimension_numbers<[1], [0], [0], [1], [0, 0, 1, 1], [], []>} : vector<32x128xbf16>, vector<128x128xbf16>, vector<32x128xf32> -> vector<32x128xf32>
    %21 = vector.broadcast %18 : vector<1x128xf32> to vector<32x128xf32>
    %22 = arith.addf %20, %21 : vector<32x128xf32>
    %c0_17 = arith.constant 0 : index
    %c0_18 = arith.constant 0 : index
    %23 = vector.load %arg8[%c0_17, %c0_18] : memref<32x128xf32, #tpu.memory_space<vmem>>, vector<32x128xf32>
    tpu.vector_store %arg8[%c0_17, %c0_18], %22 {strides = array<i32>} : memref<32x128xf32, #tpu.memory_space<vmem>>, vector<32x128xf32>,
    return
  }
  func.func @transform_0(%arg0: i32) -> (i32, i32) {
    %c0_i32 = arith.constant 0 : i32
    %c0_i32_0 = arith.constant 0 : i32
    return %arg0, %c0_i32 : i32, i32
  }
  func.func @transform_1(%arg0: i32) -> (i32, i32) {
    %c0_i32 = arith.constant 0 : i32
    %c0_i32_0 = arith.constant 0 : i32
    %c0_i32_1 = arith.constant 0 : i32
    return %c0_i32, %c0_i32_0 : i32, i32
  }
  func.func @transform_2(%arg0: i32) -> (i32, i32) {
    %c0_i32 = arith.constant 0 : i32
    %c0_i32_0 = arith.constant 0 : i32
    %c0_i32_1 = arith.constant 0 : i32
    return %c0_i32, %c0_i32_0 : i32, i32
  }
  func.func @transform_3(%arg0: i32) -> (i32, i32) {
    %c0_i32 = arith.constant 0 : i32
    %c0_i32_0 = arith.constant 0 : i32
    %c0_i32_1 = arith.constant 0 : i32
    return %c0_i32, %c0_i32_0 : i32, i32
  }
  func.func @transform_4(%arg0: i32) -> (i32, i32) {
    %c0_i32 = arith.constant 0 : i32
    %c0_i32_0 = arith.constant 0 : i32
    %c0_i32_1 = arith.constant 0 : i32
    return %c0_i32, %c0_i32_0 : i32, i32
  }
  func.func @transform_5(%arg0: i32) -> (i32, i32) {
    %c0_i32 = arith.constant 0 : i32
    %c0_i32_0 = arith.constant 0 : i32
    %c0_i32_1 = arith.constant 0 : i32
    return %c0_i32, %c0_i32_0 : i32, i32
  }
  func.func @transform_6(%arg0: i32) -> (i32, i32) {
    %c0_i32 = arith.constant 0 : i32
    %c0_i32_0 = arith.constant 0 : i32
    %c0_i32_1 = arith.constant 0 : i32
    return %c0_i32, %c0_i32_0 : i32, i32
  }
  func.func @transform_7(%arg0: i32) -> (i32, i32) {
    %c0_i32 = arith.constant 0 : i32
    %c0_i32_0 = arith.constant 0 : i32
    return %arg0, %c0_i32 : i32, i32
  }
}

</mosaic_0001>

<llo_original>
// kernel: tpu_custom_call.1
$region0: #{tpu_custom_call.1}
  #allocation0 [shape = 'u32[]', space=smem, size = 0x4, offset = 0x4, fixed_abs, tag = 'smem constant byte address 0x4 - core index']
  #allocation1 [shape = 'u32[144,128]{1,0:T(1,128)}', space=vmem, size = 0x12000, scoped, tag = 'internal scratch']
  %s0 = inlined_call_operand.hbm [shape: f32[64,128], index: 0, kind: input, shape index: {}]
  %s1 = inlined_call_operand.hbm [shape: bf16[128,128], index: 1, kind: input, shape index: {}]
  %s2 = inlined_call_operand.vmem [shape: f32[1,128], index: 2, kind: input, shape index: {}]
  %s3 = inlined_call_operand.hbm [shape: bf16[128,128], index: 3, kind: input, shape index: {}]
  %s4 = inlined_call_operand.vmem [shape: f32[1,128], index: 4, kind: input, shape index: {}]
  %s5 = inlined_call_operand.hbm [shape: bf16[128,128], index: 5, kind: input, shape index: {}]
  %s6 = inlined_call_operand.vmem [shape: f32[1,128], index: 6, kind: input, shape index: {}]
  %s7 = inlined_call_operand.hbm [shape: f32[64,128], index: 7, kind: output, shape index: {}]
  %s8 = sld [smem:[#allocation0]]
  $region77: #{tpu_custom_call.1} parent=0
    _
  %s10 = ssub.s32 1, %s8
  %s11 = scalar_select 0, %s10, %s8
  $region1: #{tpu_custom_call.1} parent=0
    #allocation2 [shape = 'u8[32768]{0}', space=vmem, size = 0x8000, scoped, tag = 'input window, operand 0']
    #allocation3 [shape = 's32[2]{0}', space=sflag, size = 0x8, scoped, tag = 'scoped memory for tpu_custom_call.1']
    #allocation4 [shape = 's32[2]{0}', space=sflag, size = 0x8, scoped, tag = 'scoped memory for tpu_custom_call.1']
    #allocation5 [shape = 'u8[32768]{0}', space=vmem, size = 0x8000, scoped, tag = 'input window, operand 1, single buffered']
    #allocation6 [shape = 's32[1]{0}', space=sflag, size = 0x4, scoped, tag = 'scoped memory for tpu_custom_call.1']
    #allocation7 [shape = 'u8[32768]{0}', space=vmem, size = 0x8000, scoped, tag = 'input window, operand 3, single buffered']
    #allocation8 [shape = 'u8[32768]{0}', space=vmem, size = 0x8000, scoped, tag = 'input window, operand 5, single buffered']
    #allocation9 [shape = 's32[1]{0}', space=sflag, size = 0x4, scoped, tag = 'scoped memory for tpu_custom_call.1']
    #allocation10 [shape = 'u8[32768]{0}', space=vmem, size = 0x8000, scoped, tag = 'output window, operand 0']
    %12 = vsyncpa [#allocation3], 0
    %s13 = scalar_lea.sflag [#allocation3], 1
    %14 = vsyncpa %s13, 0
    %15 = vsyncpa [#allocation6], 0
    %16 = vsyncpa [#allocation9], 0
    %17 = vsyncpa [#allocation4], 0
    %s18 = scalar_lea.sflag [#allocation4], 1
    %19 = vsyncpa %s18, 0
    loop: start=0, step=1, limit=4
    $region2: #{tpu_custom_call.1} parent=1 // loop_pre_header
      _
    $region3: #{tpu_custom_call.1} parent=1 // loop_header
      %s21 = sphi 0, %s25
      %p22 = scmp.ge.s32.totalorder %s21, 4
      %s31 = sphi 0, %s33
      %s34 = sphi 0, %s31
      %s35 = sphi 0, %s34
      %s51 = sphi 0, %s35
      %s55 = sphi 0, %s55
      %s57 = sphi 0, %s55
      %s58 = sphi 0, %s57
      %s72 = sphi 0, %s58
      %s76 = sphi 0, %s76
      %s78 = sphi 0, %s76
      %s79 = sphi 0, %s78
      %s93 = sphi 0, %s79
      %s97 = sphi 0, %s97
      %s99 = sphi 0, %s97
      %s100 = sphi 0, %s99
      %s114 = sphi 0, %s100
      %s118 = sphi 0, %s118
      %s120 = sphi 0, %s118
      %s121 = sphi 0, %s120
      %s135 = sphi 0, %s121
      %s139 = sphi 0, %s139
      %s141 = sphi 0, %s139
      %s142 = sphi 0, %s141
      %s156 = sphi 0, %s142
      %s160 = sphi 0, %s160
      %s162 = sphi 0, %s160
      %s163 = sphi 0, %s162
      %s177 = sphi 0, %s163
      %s183 = sphi 0, %s185
      %s186 = sphi 0, %s183
      %s187 = sphi 0, %s186
      %s203 = sphi 0, %s187
    $region4: #{tpu_custom_call.1} parent=1 // loop_header_branch
      %24 = sbr.rel (%p22) target = $region8
    $region5: #{tpu_custom_call.1} parent=1 // loop_body
      %s26 = ssub.s32 %s21, 1
      %s27 = ssub.s32 %s21, 2
      %s28 = sadd.s32 %s21, 1
      %s29 = ssub.s32 %s21, %s28
      %p30 = scmp.eq.s32.totalorder %s29, 0
      %s32 = sadd.s32 %s31, 1
      %s33 = scalar_select %p30, %s31, %s32
      %p36 = pneg %p30
      %p37 = scmp.eq.s32.totalorder %s21, 1
      %p38 = por %p36, %p37
      %p39 = scmp.ne.s32.totalorder %s31, %s34
      %p40 = scmp.eq.s32.totalorder %s21, 0
      %p41 = por %p39, %p40
      %p42 = scmp.ne.s32.totalorder %s31, %s34
      %p43 = scmp.eq.s32.totalorder %s26, 1
      %p44 = por %p42, %p43
      %p45 = scmp.ne.s32.totalorder %s34, %s35
      %p46 = scmp.eq.s32.totalorder %s26, 0
      %p47 = por %p45, %p46
      %p48 = scmp.ne.s32.totalorder %s34, %s35
      %p49 = scmp.eq.s32.totalorder %s27, 1
      %p50 = por %p48, %p49
      %p52 = scmp.ne.s32.totalorder %s35, %s51
      %p53 = scmp.eq.s32.totalorder %s27, 0
      %p54 = por %p52, %p53
      %s56 = sadd.s32 %s55, 1
      %p59 = scmp.eq.s32.totalorder %s21, 1
      %p60 = scmp.ne.s32.totalorder %s55, %s57
      %p61 = scmp.eq.s32.totalorder %s21, 0
      %p62 = por %p60, %p61
      %p63 = scmp.ne.s32.totalorder %s55, %s57
      %p64 = scmp.eq.s32.totalorder %s26, 1
      %p65 = por %p63, %p64
      %p66 = scmp.ne.s32.totalorder %s57, %s58
      %p67 = scmp.eq.s32.totalorder %s26, 0
      %p68 = por %p66, %p67
      %p69 = scmp.ne.s32.totalorder %s57, %s58
      %p70 = scmp.eq.s32.totalorder %s27, 1
      %p71 = por %p69, %p70
      %p73 = scmp.ne.s32.totalorder %s58, %s72
      %p74 = scmp.eq.s32.totalorder %s27, 0
      %p75 = por %p73, %p74
      %s77 = sadd.s32 %s76, 1
      %p80 = scmp.eq.s32.totalorder %s21, 1
      %p81 = scmp.ne.s32.totalorder %s76, %s78
      %p82 = scmp.eq.s32.totalorder %s21, 0
      %p83 = por %p81, %p82
      %p84 = scmp.ne.s32.totalorder %s76, %s78
      %p85 = scmp.eq.s32.totalorder %s26, 1
      %p86 = por %p84, %p85
      %p87 = scmp.ne.s32.totalorder %s78, %s79
      %p88 = scmp.eq.s32.totalorder %s26, 0
      %p89 = por %p87, %p88
      %p90 = scmp.ne.s32.totalorder %s78, %s79
      %p91 = scmp.eq.s32.totalorder %s27, 1
      %p92 = por %p90, %p91
      %p94 = scmp.ne.s32.totalorder %s79, %s93
      %p95 = scmp.eq.s32.totalorder %s27, 0
      %p96 = por %p94, %p95
      %s98 = sadd.s32 %s97, 1
      %p101 = scmp.eq.s32.totalorder %s21, 1
      %p102 = scmp.ne.s32.totalorder %s97, %s99
      %p103 = scmp.eq.s32.totalorder %s21, 0
      %p104 = por %p102, %p103
      %p105 = scmp.ne.s32.totalorder %s97, %s99
      %p106 = scmp.eq.s32.totalorder %s26, 1
      %p107 = por %p105, %p106
      %p108 = scmp.ne.s32.totalorder %s99, %s100
      %p109 = scmp.eq.s32.totalorder %s26, 0
      %p110 = por %p108, %p109
      %p111 = scmp.ne.s32.totalorder %s99, %s100
      %p112 = scmp.eq.s32.totalorder %s27, 1
      %p113 = por %p111, %p112
      %p115 = scmp.ne.s32.totalorder %s100, %s114
      %p116 = scmp.eq.s32.totalorder %s27, 0
      %p117 = por %p115, %p116
      %s119 = sadd.s32 %s118, 1
      %p122 = scmp.eq.s32.totalorder %s21, 1
      %p123 = scmp.ne.s32.totalorder %s118, %s120
      %p124 = scmp.eq.s32.totalorder %s21, 0
      %p125 = por %p123, %p124
      %p126 = scmp.ne.s32.totalorder %s118, %s120
      %p127 = scmp.eq.s32.totalorder %s26, 1
      %p128 = por %p126, %p127
      %p129 = scmp.ne.s32.totalorder %s120, %s121
      %p130 = scmp.eq.s32.totalorder %s26, 0
      %p131 = por %p129, %p130
      %p132 = scmp.ne.s32.totalorder %s120, %s121
      %p133 = scmp.eq.s32.totalorder %s27, 1
      %p134 = por %p132, %p133
      %p136 = scmp.ne.s32.totalorder %s121, %s135
      %p137 = scmp.eq.s32.totalorder %s27, 0
      %p138 = por %p136, %p137
      %s140 = sadd.s32 %s139, 1
      %p143 = scmp.eq.s32.totalorder %s21, 1
      %p144 = scmp.ne.s32.totalorder %s139, %s141
      %p145 = scmp.eq.s32.totalorder %s21, 0
      %p146 = por %p144, %p145
      %p147 = scmp.ne.s32.totalorder %s139, %s141
      %p148 = scmp.eq.s32.totalorder %s26, 1
      %p149 = por %p147, %p148
      %p150 = scmp.ne.s32.totalorder %s141, %s142
      %p151 = scmp.eq.s32.totalorder %s26, 0
      %p152 = por %p150, %p151
      %p153 = scmp.ne.s32.totalorder %s141, %s142
      %p154 = scmp.eq.s32.totalorder %s27, 1
      %p155 = por %p153, %p154
      %p157 = scmp.ne.s32.totalorder %s142, %s156
      %p158 = scmp.eq.s32.totalorder %s27, 0
      %p159 = por %p157, %p158
      %s161 = sadd.s32 %s160, 1
      %p164 = scmp.eq.s32.totalorder %s21, 1
      %p165 = scmp.ne.s32.totalorder %s160, %s162
      %p166 = scmp.eq.s32.totalorder %s21, 0
      %p167 = por %p165, %p166
      %p168 = scmp.ne.s32.totalorder %s160, %s162
      %p169 = scmp.eq.s32.totalorder %s26, 1
      %p170 = por %p168, %p169
      %p171 = scmp.ne.s32.totalorder %s162, %s163
      %p172 = scmp.eq.s32.totalorder %s26, 0
      %p173 = por %p171, %p172
      %p174 = scmp.ne.s32.totalorder %s162, %s163
      %p175 = scmp.eq.s32.totalorder %s27, 1
      %p176 = por %p174, %p175
      %p178 = scmp.ne.s32.totalorder %s163, %s177
      %p179 = scmp.eq.s32.totalorder %s27, 0
      %p180 = por %p178, %p179
      %s181 = ssub.s32 %s21, %s28
      %p182 = scmp.eq.s32.totalorder %s181, 0
      %s184 = sadd.s32 %s183, 1
      %s185 = scalar_select %p182, %s183, %s184
      %p188 = pneg %p182
      %p189 = scmp.eq.s32.totalorder %s21, 1
      %p190 = por %p188, %p189
      %p191 = scmp.ne.s32.totalorder %s183, %s186
      %p192 = scmp.eq.s32.totalorder %s21, 0
      %p193 = por %p191, %p192
      %p194 = scmp.ne.s32.totalorder %s183, %s186
      %p195 = scmp.eq.s32.totalorder %s26, 1
      %p196 = por %p194, %p195
      %p197 = scmp.ne.s32.totalorder %s186, %s187
      %p198 = scmp.eq.s32.totalorder %s26, 0
      %p199 = por %p197, %p198
      %p200 = scmp.ne.s32.totalorder %s186, %s187
      %p201 = scmp.eq.s32.totalorder %s27, 1
      %p202 = por %p200, %p201
      %p204 = scmp.ne.s32.totalorder %s187, %s203
      %p205 = scmp.eq.s32.totalorder %s27, 0
      %p206 = por %p204, %p205
      %p207 = scmp.le.s32.totalorder 1, %s21
      %p208 = scmp.lt.s32.totalorder %s21, 3
      %p209 = pnand %p207, %p208
      %p210 = pneg %p209
      // Predicated region
      $region9: #{tpu_custom_call.1} parent=5 // pred_check
        _
      $region10: #{tpu_custom_call.1} parent=5 // pred_check_branch
        %212 = sbr.rel (%p209) target = $region12
      $region11: #{tpu_custom_call.1} parent=5 // pred_region
        %s213 = ssub.s32 %s21, 1
        // Predicated region
        $region13: #{tpu_custom_call.1} parent=11 // pred_check
          %p214 = pneg %p68
        $region14: #{tpu_custom_call.1} parent=11 // pred_check_branch
          %216 = sbr.rel (%p214) target = $region16
        $region15: #{tpu_custom_call.1} parent=11 // pred_region
          %s218 = ssub.s32 1024, 1024
          %219 = vsyncadd [#allocation6], %s218
          %s220 = sshll.u32 [#allocation5], 4
          %s221 = int_to_ptr.vmem [resolvable:$true] %s220
          %226 = dma.hbm_to_vmem [thread:$0]  %s1, 1024, %s221, [#allocation6], 64, 64, 4
        $region16: #{tpu_custom_call.1} parent=11 // pred_fallthru
          _
        // Predicated region
        $region17: #{tpu_custom_call.1} parent=11 // pred_check
          %p227 = pneg %p89
        $region18: #{tpu_custom_call.1} parent=11 // pred_check_branch
          %229 = sbr.rel (%p227) target = $region20
        $region19: #{tpu_custom_call.1} parent=11 // pred_region
          _
        $region20: #{tpu_custom_call.1} parent=11 // pred_fallthru
          _
        // Predicated region
        $region21: #{tpu_custom_call.1} parent=11 // pred_check
          %p230 = pneg %p110
        $region22: #{tpu_custom_call.1} parent=11 // pred_check_branch
          %232 = sbr.rel (%p230) target = $region24
        $region23: #{tpu_custom_call.1} parent=11 // pred_region
          %s234 = ssub.s32 1024, 1024
          %235 = vsyncadd [#allocation6], %s234
          %s236 = sshll.u32 [#allocation7], 4
          %s237 = int_to_ptr.vmem [resolvable:$true] %s236
          %242 = dma.hbm_to_vmem [thread:$0]  %s3, 1024, %s237, [#allocation6], 64, 64, 4
        $region24: #{tpu_custom_call.1} parent=11 // pred_fallthru
          _
        // Predicated region
        $region25: #{tpu_custom_call.1} parent=11 // pred_check
          %p243 = pneg %p131
        $region26: #{tpu_custom_call.1} parent=11 // pred_check_branch
          %245 = sbr.rel (%p243) target = $region28
        $region27: #{tpu_custom_call.1} parent=11 // pred_region
          _
        $region28: #{tpu_custom_call.1} parent=11 // pred_fallthru
          _
        // Predicated region
        $region29: #{tpu_custom_call.1} parent=11 // pred_check
          %p246 = pneg %p152
        $region30: #{tpu_custom_call.1} parent=11 // pred_check_branch
          %248 = sbr.rel (%p246) target = $region32
        $region31: #{tpu_custom_call.1} parent=11 // pred_region
          %s250 = ssub.s32 1024, 1024
          %251 = vsyncadd [#allocation9], %s250
          %s252 = sshll.u32 [#allocation8], 4
          %s253 = int_to_ptr.vmem [resolvable:$true] %s252
          %258 = dma.hbm_to_vmem [thread:$0]  %s5, 1024, %s253, [#allocation9], 64, 64, 4
        $region32: #{tpu_custom_call.1} parent=11 // pred_fallthru
          _
        // Predicated region
        $region33: #{tpu_custom_call.1} parent=11 // pred_check
          %p259 = pneg %p173
        $region34: #{tpu_custom_call.1} parent=11 // pred_check_branch
          %261 = sbr.rel (%p259) target = $region36
        $region35: #{tpu_custom_call.1} parent=11 // pred_region
          _
        $region36: #{tpu_custom_call.1} parent=11 // pred_fallthru
          _
      $region12: #{tpu_custom_call.1} parent=5 // pred_fallthru
        _
      %p262 = scmp.lt.s32.totalorder %s21, 2
      // Predicated region
      $region37: #{tpu_custom_call.1} parent=5 // pred_check
        %p263 = pneg %p262
      $region38: #{tpu_custom_call.1} parent=5 // pred_check_branch
        %265 = sbr.rel (%p263) target = $region40
      $region39: #{tpu_custom_call.1} parent=5 // pred_region
        // Predicated region
        $region41: #{tpu_custom_call.1} parent=39 // pred_check
          %p266 = pneg %p41
        $region42: #{tpu_custom_call.1} parent=39 // pred_check_branch
          %268 = sbr.rel (%p266) target = $region44
        $region43: #{tpu_custom_call.1} parent=39 // pred_region
          %s269 = sand.u32 %s31, 1
          %s270 = scalar_lea.sflag [#allocation3], %s269
          %s271 = sand.u32 %s31, 1
          %s272 = smul.addr %s271, 32
          %s273 = scalar_lea.vmem [#allocation2], %s272
          %s274 = smul.u32 4, %s21
          %s276 = ssub.s32 512, 512
          %277 = vsyncadd %s270, %s276
          %s278 = smul.addr %s274, 128
          %s279 = scalar_lea.hbm %s0, %s278
          %s280 = sshll.u32 %s273, 4
          %s281 = int_to_ptr.vmem [resolvable:$true] %s280
          %286 = dma.hbm_to_vmem [thread:$0]  %s279, 512, %s281, %s270, 128, 128, 8
        $region44: #{tpu_custom_call.1} parent=39 // pred_fallthru
          _
      $region40: #{tpu_custom_call.1} parent=5 // pred_fallthru
        _
      %p287 = scmp.le.s32.totalorder 1, %s21
      %p288 = scmp.lt.s32.totalorder %s21, 3
      %p289 = pnand %p287, %p288
      %p290 = pneg %p289
      // Predicated region
      $region45: #{tpu_custom_call.1} parent=5 // pred_check
        _
      $region46: #{tpu_custom_call.1} parent=5 // pred_check_branch
        %292 = sbr.rel (%p289) target = $region48
      $region47: #{tpu_custom_call.1} parent=5 // pred_region
        %s293 = ssub.s32 %s21, 1
        %s294 = sand.u32 %s34, 1
        %s295 = scalar_lea.sflag [#allocation3], %s294
        %s296 = sand.u32 %s34, 1
        %s297 = smul.addr %s296, 32
        %s298 = scalar_lea.vmem [#allocation2], %s297
        // Predicated region
        $region49: #{tpu_custom_call.1} parent=47 // pred_check
          %p299 = pneg %p47
        $region50: #{tpu_custom_call.1} parent=47 // pred_check_branch
          %301 = sbr.rel (%p299) target = $region52
        $region51: #{tpu_custom_call.1} parent=47 // pred_region
          %302 = dma.done %s295, 512
        $region52: #{tpu_custom_call.1} parent=47 // pred_fallthru
          _
        // Predicated region
        $region53: #{tpu_custom_call.1} parent=47 // pred_check
          %p303 = pneg %p68
        $region54: #{tpu_custom_call.1} parent=47 // pred_check_branch
          %305 = sbr.rel (%p303) target = $region56
        $region55: #{tpu_custom_call.1} parent=47 // pred_region
          %306 = dma.done [#allocation6], 1024
        $region56: #{tpu_custom_call.1} parent=47 // pred_fallthru
          _
        // Predicated region
        $region57: #{tpu_custom_call.1} parent=47 // pred_check
          %p307 = pneg %p110
        $region58: #{tpu_custom_call.1} parent=47 // pred_check_branch
          %309 = sbr.rel (%p307) target = $region60
        $region59: #{tpu_custom_call.1} parent=47 // pred_region
          %310 = dma.done [#allocation6], 1024
        $region60: #{tpu_custom_call.1} parent=47 // pred_fallthru
          _
        // Predicated region
        $region61: #{tpu_custom_call.1} parent=47 // pred_check
          %p311 = pneg %p152
        $region62: #{tpu_custom_call.1} parent=47 // pred_check_branch
          %313 = sbr.rel (%p311) target = $region64
        $region63: #{tpu_custom_call.1} parent=47 // pred_region
          %314 = dma.done [#allocation9], 1024
        $region64: #{tpu_custom_call.1} parent=47 // pred_fallthru
          _
        %s315 = sand.u32 %s34, 1
        %s316 = scalar_lea.sflag [#allocation3], %s315
        %s317 = sand.u32 %s34, 1
        %s318 = smul.addr %s317, 32
        %s319 = scalar_lea.vmem [#allocation2], %s318
        %p320 = pneg %p47
        %p321 = pneg %p44
        %p322 = pneg %p68
        %p323 = pneg %p65
        %p324 = pneg %p89
        %p325 = pneg %p86
        %p326 = pneg %p110
        %p327 = pneg %p107
        %p328 = pneg %p131
        %p329 = pneg %p128
        %p330 = pneg %p152
        %p331 = pneg %p149
        %p332 = pneg %p173
        %p333 = pneg %p170
        %p334 = pneg %p199
        %p335 = pneg %p196
        %s336 = sand.u32 %s186, 1
        %s337 = scalar_lea.sflag [#allocation4], %s336
        %s338 = sand.u32 %s186, 1
        %s339 = smul.addr %s338, 32
        %s340 = scalar_lea.vmem [#allocation10], %s339
        %s341 = smul.u32 4, %s26
        %s342 = smul.u32 4, %s26
        %v344 = vld [vmem:[%s298] sm:$0xff]
        %v345 = vld [vmem:[%s298 + $0x8] sm:$0xff]
        %v346 = vld [vmem:[%s298 + $0x10] sm:$0xff]
        %v347 = vld [vmem:[%s298 + $0x18] sm:$0xff]
        %v348 = vld [vmem:[#allocation5] sm:$0xf]
        %v349 = vld [vmem:[#allocation5 + $0x4] sm:$0xf]
        %v350 = vld [vmem:[#allocation5 + $0x8] sm:$0xf]
        %v351 = vld [vmem:[#allocation5 + $0xc] sm:$0xf]
        %v352 = vld [vmem:[#allocation5 + $0x10] sm:$0xf]
        %v353 = vld [vmem:[#allocation5 + $0x14] sm:$0xf]
        %v354 = vld [vmem:[#allocation5 + $0x18] sm:$0xf]
        %v355 = vld [vmem:[#allocation5 + $0x1c] sm:$0xf]
        %v356 = vld [vmem:[#allocation5 + $0x20] sm:$0xf]
        %v357 = vld [vmem:[#allocation5 + $0x24] sm:$0xf]
        %v358 = vld [vmem:[#allocation5 + $0x28] sm:$0xf]
        %v359 = vld [vmem:[#allocation5 + $0x2c] sm:$0xf]
        %v360 = vld [vmem:[#allocation5 + $0x30] sm:$0xf]
        %v361 = vld [vmem:[#allocation5 + $0x34] sm:$0xf]
        %v362 = vld [vmem:[#allocation5 + $0x38] sm:$0xf]
        %v363 = vld [vmem:[#allocation5 + $0x3c] sm:$0xf]
        %v364 = vld [vmem:[%s2] sm:$0x1]
        %v365 = vpack.c.bf16 %v345, %v344
        %v366 = vpack.c.bf16 %v347, %v346
        %v368 = vlaneseq
        %v369 = vshrl.u32 %v368, 7
        %v370 = vsub.s32 0, %v369
        %v371 = vrot.slane %v364, %v370
        %v389 = vunpack.c.l.b16 %v348
        %v390 = vunpack.c.l.b16 %v349
        %v391 = vunpack.c.l.b16 %v350
        %v392 = vunpack.c.l.b16 %v351
        %v393 = vunpack.c.l.b16 %v352
        %v394 = vunpack.c.l.b16 %v353
        %v395 = vunpack.c.l.b16 %v354
        %v396 = vunpack.c.l.b16 %v355
        %v397 = vunpack.c.l.b16 %v356
        %v398 = vunpack.c.l.b16 %v357
        %v399 = vunpack.c.l.b16 %v358
        %v400 = vunpack.c.l.b16 %v359
        %v401 = vunpack.c.l.b16 %v360
        %v402 = vunpack.c.l.b16 %v361
        %v403 = vunpack.c.l.b16 %v362
        %v404 = vunpack.c.l.b16 %v363
        %v405 = vpack.c.b16 %v390, %v389
        %v406 = vpack.c.b16 %v392, %v391
        %v407 = vpack.c.b16 %v394, %v393
        %v408 = vpack.c.b16 %v396, %v395
        %v409 = vpack.c.b16 %v398, %v397
        %v410 = vpack.c.b16 %v400, %v399
        %v411 = vpack.c.b16 %v402, %v401
        %v412 = vpack.c.b16 %v404, %v403
        %421 = vmatprep.subr.bf16.mxu0 0
        %422 = vmatpush1.bf16.msra.mxu0 %v405
        %423 = vmatprep.subr.bf16.mxu0 0
        %424 = vmatpush1.bf16.msra.mxu0 %v406
        %425 = vmatprep.subr.bf16.mxu0 0
        %426 = vmatpush1.bf16.msra.mxu0 %v407
        %427 = vmatprep.subr.bf16.mxu0 0
        %428 = vmatpush1.bf16.msra.mxu0 %v408
        %429 = vmatprep.subr.bf16.mxu0 0
        %430 = vmatpush1.bf16.msra.mxu0 %v409
        %431 = vmatprep.subr.bf16.mxu0 0
        %432 = vmatpush1.bf16.msra.mxu0 %v410
        %433 = vmatprep.subr.bf16.mxu0 0
        %434 = vmatpush1.bf16.msra.mxu0 %v411
        %435 = vmatprep.subr.bf16.mxu0 0
        %436 = vmatpush1.bf16.msra.mxu0 %v412
        %437 = vmatprep.subr.bf16.mxu0 0
        %438 = vmatpush1.bf16.msra.mxu0 0
        %439 = vmatprep.subr.bf16.mxu0 0
        %440 = vmatpush1.bf16.msra.mxu0 0
        %441 = vmatprep.subr.bf16.mxu0 0
        %442 = vmatpush1.bf16.msra.mxu0 0
        %443 = vmatprep.subr.bf16.mxu0 0
        %444 = vmatpush1.bf16.msra.mxu0 0
        %445 = vmatprep.subr.bf16.mxu0 0
        %446 = vmatpush1.bf16.msra.mxu0 0
        %447 = vmatprep.subr.bf16.mxu0 0
        %448 = vmatpush1.bf16.msra.mxu0 0
        %449 = vmatprep.subr.bf16.mxu0 0
        %450 = vmatpush1.bf16.msra.mxu0 0
        %451 = vmatprep.subr.bf16.mxu0 0
        %452 = vmatpush1.bf16.msra.mxu0 0
        %453 = vmatprep.mubr.bf16.mxu0 0
        %454 = vmatmul.mubr.bf16.gmra.mrb[0].mxu0 %v365
        %v455 = vpop.f32.mrb[0].mxu0
        %v456 = vadd.f32 %v371, %v455
        %v457 = vpop.f32.mrb[0].mxu0
        %v458 = vpop.f32.mrb[0].mxu0
        %v459 = vadd.f32 %v371, %v458
        %v460 = vpop.f32.mrb[0].mxu0
        %461 = vmatprep.mubr.bf16.mxu0 0
        %462 = vmatmul.mubr.bf16.gmra.mrb[0].mxu0 %v366
        %v463 = vpop.f32.mrb[0].mxu0
        %v464 = vadd.f32 %v371, %v463
        %v465 = vpop.f32.mrb[0].mxu0
        %v466 = vpop.f32.mrb[0].mxu0
        %v467 = vadd.f32 %v371, %v466
        %v468 = vpop.f32.mrb[0].mxu0
        %469 = vdwg.mxu0
        %v470 = vmax.f32 %v456, 0.0
        %v471 = vmax.f32 %v459, 0.0
        %v472 = vmax.f32 %v464, 0.0
        %v473 = vmax.f32 %v467, 0.0
        %v474 = vld [vmem:[#allocation7] sm:$0xf]
        %v475 = vld [vmem:[#allocation7 + $0x4] sm:$0xf]
        %v476 = vld [vmem:[#allocation7 + $0x8] sm:$0xf]
        %v477 = vld [vmem:[#allocation7 + $0xc] sm:$0xf]
        %v478 = vld [vmem:[#allocation7 + $0x10] sm:$0xf]
        %v479 = vld [vmem:[#allocation7 + $0x14] sm:$0xf]
        %v480 = vld [vmem:[#allocation7 + $0x18] sm:$0xf]
        %v481 = vld [vmem:[#allocation7 + $0x1c] sm:$0xf]
        %v482 = vld [vmem:[#allocation7 + $0x20] sm:$0xf]
        %v483 = vld [vmem:[#allocation7 + $0x24] sm:$0xf]
        %v484 = vld [vmem:[#allocation7 + $0x28] sm:$0xf]
        %v485 = vld [vmem:[#allocation7 + $0x2c] sm:$0xf]
        %v486 = vld [vmem:[#allocation7 + $0x30] sm:$0xf]
        %v487 = vld [vmem:[#allocation7 + $0x34] sm:$0xf]
        %v488 = vld [vmem:[#allocation7 + $0x38] sm:$0xf]
        %v489 = vld [vmem:[#allocation7 + $0x3c] sm:$0xf]
        %v490 = vld [vmem:[%s4] sm:$0x1]
        %v491 = vpack.c.bf16 %v471, %v470
        %v492 = vpack.c.bf16 %v473, %v472
        %v494 = vlaneseq
        %v495 = vshrl.u32 %v494, 7
        %v496 = vsub.s32 0, %v495
        %v497 = vrot.slane %v490, %v496
        %v515 = vunpack.c.l.b16 %v474
        %v516 = vunpack.c.l.b16 %v475
        %v517 = vunpack.c.l.b16 %v476
        %v518 = vunpack.c.l.b16 %v477
        %v519 = vunpack.c.l.b16 %v478
        %v520 = vunpack.c.l.b16 %v479
        %v521 = vunpack.c.l.b16 %v480
        %v522 = vunpack.c.l.b16 %v481
        %v523 = vunpack.c.l.b16 %v482
        %v524 = vunpack.c.l.b16 %v483
        %v525 = vunpack.c.l.b16 %v484
        %v526 = vunpack.c.l.b16 %v485
        %v527 = vunpack.c.l.b16 %v486
        %v528 = vunpack.c.l.b16 %v487
        %v529 = vunpack.c.l.b16 %v488
        %v530 = vunpack.c.l.b16 %v489
        %v531 = vpack.c.b16 %v516, %v515
        %v532 = vpack.c.b16 %v518, %v517
        %v533 = vpack.c.b16 %v520, %v519
        %v534 = vpack.c.b16 %v522, %v521
        %v535 = vpack.c.b16 %v524, %v523
        %v536 = vpack.c.b16 %v526, %v525
        %v537 = vpack.c.b16 %v528, %v527
        %v538 = vpack.c.b16 %v530, %v529
        %547 = vmatprep.subr.bf16.mxu0 0
        %548 = vmatpush1.bf16.msra.mxu0 %v531
        %549 = vmatprep.subr.bf16.mxu0 0
        %550 = vmatpush1.bf16.msra.mxu0 %v532
        %551 = vmatprep.subr.bf16.mxu0 0
        %552 = vmatpush1.bf16.msra.mxu0 %v533
        %553 = vmatprep.subr.bf16.mxu0 0
        %554 = vmatpush1.bf16.msra.mxu0 %v534
        %555 = vmatprep.subr.bf16.mxu0 0
        %556 = vmatpush1.bf16.msra.mxu0 %v535
        %557 = vmatprep.subr.bf16.mxu0 0
        %558 = vmatpush1.bf16.msra.mxu0 %v536
        %559 = vmatprep.subr.bf16.mxu0 0
        %560 = vmatpush1.bf16.msra.mxu0 %v537
        %561 = vmatprep.subr.bf16.mxu0 0
        %562 = vmatpush1.bf16.msra.mxu0 %v538
        %563 = vmatprep.subr.bf16.mxu0 0
        %564 = vmatpush1.bf16.msra.mxu0 0
        %565 = vmatprep.subr.bf16.mxu0 0
        %566 = vmatpush1.bf16.msra.mxu0 0
        %567 = vmatprep.subr.bf16.mxu0 0
        %568 = vmatpush1.bf16.msra.mxu0 0
        %569 = vmatprep.subr.bf16.mxu0 0
        %570 = vmatpush1.bf16.msra.mxu0 0
        %571 = vmatprep.subr.bf16.mxu0 0
        %572 = vmatpush1.bf16.msra.mxu0 0
        %573 = vmatprep.subr.bf16.mxu0 0
        %574 = vmatpush1.bf16.msra.mxu0 0
        %575 = vmatprep.subr.bf16.mxu0 0
        %576 = vmatpush1.bf16.msra.mxu0 0
        %577 = vmatprep.subr.bf16.mxu0 0
        %578 = vmatpush1.bf16.msra.mxu0 0
        %579 = vmatprep.mubr.bf16.mxu0 0
        %580 = vmatmul.mubr.bf16.gmra.mrb[0].mxu0 %v491
        %v581 = vpop.f32.mrb[0].mxu0
        %v582 = vadd.f32 %v497, %v581
        %v583 = vpop.f32.mrb[0].mxu0
        %v584 = vpop.f32.mrb[0].mxu0
        %v585 = vadd.f32 %v497, %v584
        %v586 = vpop.f32.mrb[0].mxu0
        %587 = vmatprep.mubr.bf16.mxu0 0
        %588 = vmatmul.mubr.bf16.gmra.mrb[0].mxu0 %v492
        %v589 = vpop.f32.mrb[0].mxu0
        %v590 = vadd.f32 %v497, %v589
        %v591 = vpop.f32.mrb[0].mxu0
        %v592 = vpop.f32.mrb[0].mxu0
        %v593 = vadd.f32 %v497, %v592
        %v594 = vpop.f32.mrb[0].mxu0
        %595 = vdwg.mxu0
        %v596 = vmax.f32 %v582, 0.0
        %v597 = vmax.f32 %v585, 0.0
        %v598 = vmax.f32 %v590, 0.0
        %v599 = vmax.f32 %v593, 0.0
        %v600 = vld [vmem:[#allocation8] sm:$0xf]
        %v601 = vld [vmem:[#allocation8 + $0x4] sm:$0xf]
        %v602 = vld [vmem:[#allocation8 + $0x8] sm:$0xf]
        %v603 = vld [vmem:[#allocation8 + $0xc] sm:$0xf]
        %v604 = vld [vmem:[#allocation8 + $0x10] sm:$0xf]
        %v605 = vld [vmem:[#allocation8 + $0x14] sm:$0xf]
        %v606 = vld [vmem:[#allocation8 + $0x18] sm:$0xf]
        %v607 = vld [vmem:[#allocation8 + $0x1c] sm:$0xf]
        %v608 = vld [vmem:[#allocation8 + $0x20] sm:$0xf]
        %v609 = vld [vmem:[#allocation8 + $0x24] sm:$0xf]
        %v610 = vld [vmem:[#allocation8 + $0x28] sm:$0xf]
        %v611 = vld [vmem:[#allocation8 + $0x2c] sm:$0xf]
        %v612 = vld [vmem:[#allocation8 + $0x30] sm:$0xf]
        %v613 = vld [vmem:[#allocation8 + $0x34] sm:$0xf]
        %v614 = vld [vmem:[#allocation8 + $0x38] sm:$0xf]
        %v615 = vld [vmem:[#allocation8 + $0x3c] sm:$0xf]
        %v616 = vld [vmem:[%s6] sm:$0x1]
        %v617 = vpack.c.bf16 %v597, %v596
        %v618 = vpack.c.bf16 %v599, %v598
        %v620 = vlaneseq
        %v621 = vshrl.u32 %v620, 7
        %v622 = vsub.s32 0, %v621
        %v623 = vrot.slane %v616, %v622
        %v641 = vunpack.c.l.b16 %v600
        %v642 = vunpack.c.l.b16 %v601
        %v643 = vunpack.c.l.b16 %v602
        %v644 = vunpack.c.l.b16 %v603
        %v645 = vunpack.c.l.b16 %v604
        %v646 = vunpack.c.l.b16 %v605
        %v647 = vunpack.c.l.b16 %v606
        %v648 = vunpack.c.l.b16 %v607
        %v649 = vunpack.c.l.b16 %v608
        %v650 = vunpack.c.l.b16 %v609
        %v651 = vunpack.c.l.b16 %v610
        %v652 = vunpack.c.l.b16 %v611
        %v653 = vunpack.c.l.b16 %v612
        %v654 = vunpack.c.l.b16 %v613
        %v655 = vunpack.c.l.b16 %v614
        %v656 = vunpack.c.l.b16 %v615
        %v657 = vpack.c.b16 %v642, %v641
        %v658 = vpack.c.b16 %v644, %v643
        %v659 = vpack.c.b16 %v646, %v645
        %v660 = vpack.c.b16 %v648, %v647
        %v661 = vpack.c.b16 %v650, %v649
        %v662 = vpack.c.b16 %v652, %v651
        %v663 = vpack.c.b16 %v654, %v653
        %v664 = vpack.c.b16 %v656, %v655
        %673 = vmatprep.subr.bf16.mxu0 0
        %674 = vmatpush1.bf16.msra.mxu0 %v657
        %675 = vmatprep.subr.bf16.mxu0 0
        %676 = vmatpush1.bf16.msra.mxu0 %v658
        %677 = vmatprep.subr.bf16.mxu0 0
        %678 = vmatpush1.bf16.msra.mxu0 %v659
        %679 = vmatprep.subr.bf16.mxu0 0
        %680 = vmatpush1.bf16.msra.mxu0 %v660
        %681 = vmatprep.subr.bf16.mxu0 0
        %682 = vmatpush1.bf16.msra.mxu0 %v661
        %683 = vmatprep.subr.bf16.mxu0 0
        %684 = vmatpush1.bf16.msra.mxu0 %v662
        %685 = vmatprep.subr.bf16.mxu0 0
        %686 = vmatpush1.bf16.msra.mxu0 %v663
        %687 = vmatprep.subr.bf16.mxu0 0
        %688 = vmatpush1.bf16.msra.mxu0 %v664
        %689 = vmatprep.subr.bf16.mxu0 0
        %690 = vmatpush1.bf16.msra.mxu0 0
        %691 = vmatprep.subr.bf16.mxu0 0
        %692 = vmatpush1.bf16.msra.mxu0 0
        %693 = vmatprep.subr.bf16.mxu0 0
        %694 = vmatpush1.bf16.msra.mxu0 0
        %695 = vmatprep.subr.bf16.mxu0 0
        %696 = vmatpush1.bf16.msra.mxu0 0
        %697 = vmatprep.subr.bf16.mxu0 0
        %698 = vmatpush1.bf16.msra.mxu0 0
        %699 = vmatprep.subr.bf16.mxu0 0
        %700 = vmatpush1.bf16.msra.mxu0 0
        %701 = vmatprep.subr.bf16.mxu0 0
        %702 = vmatpush1.bf16.msra.mxu0 0
        %703 = vmatprep.subr.bf16.mxu0 0
        %704 = vmatpush1.bf16.msra.mxu0 0
        %705 = vmatprep.mubr.bf16.mxu0 0
        %706 = vmatmul.mubr.bf16.gmra.mrb[0].mxu0 %v617
        %v707 = vpop.f32.mrb[0].mxu0
        %v708 = vadd.f32 %v623, %v707
        %v709 = vpop.f32.mrb[0].mxu0
        %v710 = vpop.f32.mrb[0].mxu0
        %v711 = vadd.f32 %v623, %v710
        %v712 = vpop.f32.mrb[0].mxu0
        %713 = vmatprep.mubr.bf16.mxu0 0
        %714 = vmatmul.mubr.bf16.gmra.mrb[0].mxu0 %v618
        %v715 = vpop.f32.mrb[0].mxu0
        %v716 = vadd.f32 %v623, %v715
        %v717 = vpop.f32.mrb[0].mxu0
        %v718 = vpop.f32.mrb[0].mxu0
        %v719 = vadd.f32 %v623, %v718
        %v720 = vpop.f32.mrb[0].mxu0
        %721 = vdwg.mxu0
        %722 = vst [vmem:[%s340] sm:$0xff] %v708
        %723 = vst [vmem:[%s340 + $0x8] sm:$0xff] %v711
        %724 = vst [vmem:[%s340 + $0x10] sm:$0xff] %v716
        %725 = vst [vmem:[%s340 + $0x18] sm:$0xff] %v719
        %s726 = sand.u32 %s186, 1
        %s727 = scalar_lea.sflag [#allocation4], %s726
        %s728 = sand.u32 %s186, 1
        %s729 = smul.addr %s728, 32
        %s730 = scalar_lea.vmem [#allocation10], %s729
        // Predicated region
        $region65: #{tpu_custom_call.1} parent=47 // pred_check
          %p731 = pneg %p196
        $region66: #{tpu_custom_call.1} parent=47 // pred_check_branch
          %733 = sbr.rel (%p731) target = $region68
        $region67: #{tpu_custom_call.1} parent=47 // pred_region
          %s734 = smul.u32 4, %s26
          %s736 = ssub.s32 512, 512
          %737 = vsyncadd %s727, %s736
          %s738 = smul.addr %s734, 128
          %s739 = scalar_lea.hbm %s7, %s738
          %s740 = sshll.u32 %s730, 4
          %s741 = int_to_ptr.vmem [resolvable:$true] %s740
          %746 = dma.vmem_to_hbm [thread:$0]  %s741, 512, %s739, %s727, 128, 128, 8
        $region68: #{tpu_custom_call.1} parent=47 // pred_fallthru
          _
      $region48: #{tpu_custom_call.1} parent=5 // pred_fallthru
        _
      %p747 = scmp.le.s32.totalorder 2, %s21
      // Predicated region
      $region69: #{tpu_custom_call.1} parent=5 // pred_check
        %p748 = pneg %p747
      $region70: #{tpu_custom_call.1} parent=5 // pred_check_branch
        %750 = sbr.rel (%p748) target = $region72
      $region71: #{tpu_custom_call.1} parent=5 // pred_region
        %s751 = ssub.s32 %s21, 2
        // Predicated region
        $region73: #{tpu_custom_call.1} parent=71 // pred_check
          %p752 = pneg %p202
        $region74: #{tpu_custom_call.1} parent=71 // pred_check_branch
          %754 = sbr.rel (%p752) target = $region76
        $region75: #{tpu_custom_call.1} parent=71 // pred_region
          %s755 = sand.u32 %s187, 1
          %s756 = scalar_lea.sflag [#allocation4], %s755
          %s757 = sand.u32 %s187, 1
          %s758 = smul.addr %s757, 32
          %s759 = scalar_lea.vmem [#allocation10], %s758
          %760 = dma.done %s756, 512
        $region76: #{tpu_custom_call.1} parent=71 // pred_fallthru
          _
      $region72: #{tpu_custom_call.1} parent=5 // pred_fallthru
        _
    $region6: #{tpu_custom_call.1} parent=1 // loop_footer
      %s25 = sadd.s32 1, %s21
    $region7: #{tpu_custom_call.1} parent=1 // loop_footer_branch
      %20 = sbr.rel target = $region3
    $region8: #{tpu_custom_call.1} parent=1 // loop_exit
      _
    %761 = vsyncpa [#allocation3], 1
    %s762 = scalar_lea.sflag [#allocation3], 1
    %763 = vsyncpa %s762, 1
    %764 = vsyncpa [#allocation6], 1
    %765 = vsyncpa [#allocation9], 1
    %766 = vsyncpa [#allocation4], 1
    %s767 = scalar_lea.sflag [#allocation4], 1
    %768 = vsyncpa %s767, 1

// kernel: tpu_custom_call.1
$region0: #{tpu_custom_call.1}
  #allocation0 [shape = 'u32[]', space=smem, size = 0x4, offset = 0x4, fixed_abs, tag = 'smem constant byte address 0x4 - core index']
  #allocation1 [shape = 'u32[144,128]{1,0:T(1,128)}', space=vmem, size = 0x12000, scoped, tag = 'internal scratch']
  %s0 = inlined_call_operand.hbm [shape: f32[64,128], index: 0, kind: input, shape index: {}]
  %s1 = inlined_call_operand.hbm [shape: bf16[128,128], index: 1, kind: input, shape index: {}]
  %s2 = inlined_call_operand.vmem [shape: f32[1,128], index: 2, kind: input, shape index: {}]
  %s3 = inlined_call_operand.hbm [shape: bf16[128,128], index: 3, kind: input, shape index: {}]
  %s4 = inlined_call_operand.vmem [shape: f32[1,128], index: 4, kind: input, shape index: {}]
  %s5 = inlined_call_operand.hbm [shape: bf16[128,128], index: 5, kind: input, shape index: {}]
  %s6 = inlined_call_operand.vmem [shape: f32[1,128], index: 6, kind: input, shape index: {}]
  %s7 = inlined_call_operand.hbm [shape: f32[64,128], index: 7, kind: output, shape index: {}]
  %s8 = sld [smem:[#allocation0]]
  $region77: #{tpu_custom_call.1} parent=0
    _
  %s10 = ssub.s32 1, %s8
  %s11 = scalar_select 0, %s10, %s8
  $region1: #{tpu_custom_call.1} parent=0
    #allocation2 [shape = 'u8[32768]{0}', space=vmem, size = 0x8000, scoped, tag = 'input window, operand 0']
    #allocation3 [shape = 's32[2]{0}', space=sflag, size = 0x8, scoped, tag = 'scoped memory for tpu_custom_call.1']
    #allocation4 [shape = 's32[2]{0}', space=sflag, size = 0x8, scoped, tag = 'scoped memory for tpu_custom_call.1']
    #allocation5 [shape = 'u8[32768]{0}', space=vmem, size = 0x8000, scoped, tag = 'input window, operand 1, single buffered']
    #allocation6 [shape = 's32[1]{0}', space=sflag, size = 0x4, scoped, tag = 'scoped memory for tpu_custom_call.1']
    #allocation7 [shape = 'u8[32768]{0}', space=vmem, size = 0x8000, scoped, tag = 'input window, operand 3, single buffered']
    #allocation8 [shape = 'u8[32768]{0}', space=vmem, size = 0x8000, scoped, tag = 'input window, operand 5, single buffered']
    #allocation9 [shape = 's32[1]{0}', space=sflag, size = 0x4, scoped, tag = 'scoped memory for tpu_custom_call.1']
    #allocation10 [shape = 'u8[32768]{0}', space=vmem, size = 0x8000, scoped, tag = 'output window, operand 0']
    %12 = vsyncpa [#allocation3], 0
    %s13 = scalar_lea.sflag [#allocation3], 1
    %14 = vsyncpa %s13, 0
    %15 = vsyncpa [#allocation6], 0
    %16 = vsyncpa [#allocation9], 0
    %17 = vsyncpa [#allocation4], 0
    %s18 = scalar_lea.sflag [#allocation4], 1
    %19 = vsyncpa %s18, 0
    loop: start=0, step=1, limit=4
    $region2: #{tpu_custom_call.1} parent=1 // loop_pre_header
      _
    $region3: #{tpu_custom_call.1} parent=1 // loop_header
      %s21 = sphi 0, %s25
      %p22 = scmp.ge.s32.totalorder %s21, 4
      %s31 = sphi 0, %s33
      %s34 = sphi 0, %s31
      %s35 = sphi 0, %s34
      %s51 = sphi 0, %s35
      %s55 = sphi 0, %s55
      %s57 = sphi 0, %s55
      %s58 = sphi 0, %s57
      %s72 = sphi 0, %s58
      %s76 = sphi 0, %s76
      %s78 = sphi 0, %s76
      %s79 = sphi 0, %s78
      %s93 = sphi 0, %s79
      %s97 = sphi 0, %s97
      %s99 = sphi 0, %s97
      %s100 = sphi 0, %s99
      %s114 = sphi 0, %s100
      %s118 = sphi 0, %s118
      %s120 = sphi 0, %s118
      %s121 = sphi 0, %s120
      %s135 = sphi 0, %s121
      %s139 = sphi 0, %s139
      %s141 = sphi 0, %s139
      %s142 = sphi 0, %s141
      %s156 = sphi 0, %s142
      %s160 = sphi 0, %s160
      %s162 = sphi 0, %s160
      %s163 = sphi 0, %s162
      %s177 = sphi 0, %s163
      %s183 = sphi 0, %s185
      %s186 = sphi 0, %s183
      %s187 = sphi 0, %s186
      %s203 = sphi 0, %s187
    $region4: #{tpu_custom_call.1} parent=1 // loop_header_branch
      %24 = sbr.rel (%p22) target = $region8
    $region5: #{tpu_custom_call.1} parent=1 // loop_body
      %s26 = ssub.s32 %s21, 1
      %s27 = ssub.s32 %s21, 2
      %s28 = sadd.s32 %s21, 1
      %s29 = ssub.s32 %s21, %s28
      %p30 = scmp.eq.s32.totalorder %s29, 0
      %s32 = sadd.s32 %s31, 1
      %s33 = scalar_select %p30, %s31, %s32
      %p36 = pneg %p30
      %p37 = scmp.eq.s32.totalorder %s21, 1
      %p38 = por %p36, %p37
      %p39 = scmp.ne.s32.totalorder %s31, %s34
      %p40 = scmp.eq.s32.totalorder %s21, 0
      %p41 = por %p39, %p40
      %p42 = scmp.ne.s32.totalorder %s31, %s34
      %p43 = scmp.eq.s32.totalorder %s26, 1
      %p44 = por %p42, %p43
      %p45 = scmp.ne.s32.totalorder %s34, %s35
      %p46 = scmp.eq.s32.totalorder %s26, 0
      %p47 = por %p45, %p46
      %p48 = scmp.ne.s32.totalorder %s34, %s35
      %p49 = scmp.eq.s32.totalorder %s27, 1
      %p50 = por %p48, %p49
      %p52 = scmp.ne.s32.totalorder %s35, %s51
      %p53 = scmp.eq.s32.totalorder %s27, 0
      %p54 = por %p52, %p53
      %s56 = sadd.s32 %s55, 1
      %p59 = scmp.eq.s32.totalorder %s21, 1
      %p60 = scmp.ne.s32.totalorder %s55, %s57
      %p61 = scmp.eq.s32.totalorder %s21, 0
      %p62 = por %p60, %p61
      %p63 = scmp.ne.s32.totalorder %s55, %s57
      %p64 = scmp.eq.s32.totalorder %s26, 1
      %p65 = por %p63, %p64
      %p66 = scmp.ne.s32.totalorder %s57, %s58
      %p67 = scmp.eq.s32.totalorder %s26, 0
      %p68 = por %p66, %p67
      %p69 = scmp.ne.s32.totalorder %s57, %s58
      %p70 = scmp.eq.s32.totalorder %s27, 1
      %p71 = por %p69, %p70
      %p73 = scmp.ne.s32.totalorder %s58, %s72
      %p74 = scmp.eq.s32.totalorder %s27, 0
      %p75 = por %p73, %p74
      %s77 = sadd.s32 %s76, 1
      %p80 = scmp.eq.s32.totalorder %s21, 1
      %p81 = scmp.ne.s32.totalorder %s76, %s78
      %p82 = scmp.eq.s32.totalorder %s21, 0
      %p83 = por %p81, %p82
      %p84 = scmp.ne.s32.totalorder %s76, %s78
      %p85 = scmp.eq.s32.totalorder %s26, 1
      %p86 = por %p84, %p85
      %p87 = scmp.ne.s32.totalorder %s78, %s79
      %p88 = scmp.eq.s32.totalorder %s26, 0
      %p89 = por %p87, %p88
      %p90 = scmp.ne.s32.totalorder %s78, %s79
      %p91 = scmp.eq.s32.totalorder %s27, 1
      %p92 = por %p90, %p91
      %p94 = scmp.ne.s32.totalorder %s79, %s93
      %p95 = scmp.eq.s32.totalorder %s27, 0
      %p96 = por %p94, %p95
      %s98 = sadd.s32 %s97, 1
      %p101 = scmp.eq.s32.totalorder %s21, 1
      %p102 = scmp.ne.s32.totalorder %s97, %s99
      %p103 = scmp.eq.s32.totalorder %s21, 0
      %p104 = por %p102, %p103
      %p105 = scmp.ne.s32.totalorder %s97, %s99
      %p106 = scmp.eq.s32.totalorder %s26, 1
      %p107 = por %p105, %p106
      %p108 = scmp.ne.s32.totalorder %s99, %s100
      %p109 = scmp.eq.s32.totalorder %s26, 0
      %p110 = por %p108, %p109
      %p111 = scmp.ne.s32.totalorder %s99, %s100
      %p112 = scmp.eq.s32.totalorder %s27, 1
      %p113 = por %p111, %p112
      %p115 = scmp.ne.s32.totalorder %s100, %s114
      %p116 = scmp.eq.s32.totalorder %s27, 0
      %p117 = por %p115, %p116
      %s119 = sadd.s32 %s118, 1
      %p122 = scmp.eq.s32.totalorder %s21, 1
      %p123 = scmp.ne.s32.totalorder %s118, %s120
      %p124 = scmp.eq.s32.totalorder %s21, 0
      %p125 = por %p123, %p124
      %p126 = scmp.ne.s32.totalorder %s118, %s120
      %p127 = scmp.eq.s32.totalorder %s26, 1
      %p128 = por %p126, %p127
      %p129 = scmp.ne.s32.totalorder %s120, %s121
      %p130 = scmp.eq.s32.totalorder %s26, 0
      %p131 = por %p129, %p130
      %p132 = scmp.ne.s32.totalorder %s120, %s121
      %p133 = scmp.eq.s32.totalorder %s27, 1
      %p134 = por %p132, %p133
      %p136 = scmp.ne.s32.totalorder %s121, %s135
      %p137 = scmp.eq.s32.totalorder %s27, 0
      %p138 = por %p136, %p137
      %s140 = sadd.s32 %s139, 1
      %p143 = scmp.eq.s32.totalorder %s21, 1
      %p144 = scmp.ne.s32.totalorder %s139, %s141
      %p145 = scmp.eq.s32.totalorder %s21, 0
      %p146 = por %p144, %p145
      %p147 = scmp.ne.s32.totalorder %s139, %s141
      %p148 = scmp.eq.s32.totalorder %s26, 1
      %p149 = por %p147, %p148
      %p150 = scmp.ne.s32.totalorder %s141, %s142
      %p151 = scmp.eq.s32.totalorder %s26, 0
      %p152 = por %p150, %p151
      %p153 = scmp.ne.s32.totalorder %s141, %s142
      %p154 = scmp.eq.s32.totalorder %s27, 1
      %p155 = por %p153, %p154
      %p157 = scmp.ne.s32.totalorder %s142, %s156
      %p158 = scmp.eq.s32.totalorder %s27, 0
      %p159 = por %p157, %p158
      %s161 = sadd.s32 %s160, 1
      %p164 = scmp.eq.s32.totalorder %s21, 1
      %p165 = scmp.ne.s32.totalorder %s160, %s162
      %p166 = scmp.eq.s32.totalorder %s21, 0
      %p167 = por %p165, %p166
      %p168 = scmp.ne.s32.totalorder %s160, %s162
      %p169 = scmp.eq.s32.totalorder %s26, 1
      %p170 = por %p168, %p169
      %p171 = scmp.ne.s32.totalorder %s162, %s163
      %p172 = scmp.eq.s32.totalorder %s26, 0
      %p173 = por %p171, %p172
      %p174 = scmp.ne.s32.totalorder %s162, %s163
      %p175 = scmp.eq.s32.totalorder %s27, 1
      %p176 = por %p174, %p175
      %p178 = scmp.ne.s32.totalorder %s163, %s177
      %p179 = scmp.eq.s32.totalorder %s27, 0
      %p180 = por %p178, %p179
      %s181 = ssub.s32 %s21, %s28
      %p182 = scmp.eq.s32.totalorder %s181, 0
      %s184 = sadd.s32 %s183, 1
      %s185 = scalar_select %p182, %s183, %s184
      %p188 = pneg %p182
      %p189 = scmp.eq.s32.totalorder %s21, 1
      %p190 = por %p188, %p189
      %p191 = scmp.ne.s32.totalorder %s183, %s186
      %p192 = scmp.eq.s32.totalorder %s21, 0
      %p193 = por %p191, %p192
      %p194 = scmp.ne.s32.totalorder %s183, %s186
      %p195 = scmp.eq.s32.totalorder %s26, 1
      %p196 = por %p194, %p195
      %p197 = scmp.ne.s32.totalorder %s186, %s187
      %p198 = scmp.eq.s32.totalorder %s26, 0
      %p199 = por %p197, %p198
      %p200 = scmp.ne.s32.totalorder %s186, %s187
      %p201 = scmp.eq.s32.totalorder %s27, 1
      %p202 = por %p200, %p201
      %p204 = scmp.ne.s32.totalorder %s187, %s203
      %p205 = scmp.eq.s32.totalorder %s27, 0
      %p206 = por %p204, %p205
      %p207 = scmp.le.s32.totalorder 1, %s21
      %p208 = scmp.lt.s32.totalorder %s21, 3
      %p209 = pnand %p207, %p208
      %p210 = pneg %p209
      // Predicated region
      $region9: #{tpu_custom_call.1} parent=5 // pred_check
        _
      $region10: #{tpu_custom_call.1} parent=5 // pred_check_branch
        %212 = sbr.rel (%p209) target = $region12
      $region11: #{tpu_custom_call.1} parent=5 // pred_region
        %s213 = ssub.s32 %s21, 1
        // Predicated region
        $region13: #{tpu_custom_call.1} parent=11 // pred_check
          %p214 = pneg %p68
        $region14: #{tpu_custom_call.1} parent=11 // pred_check_branch
          %216 = sbr.rel (%p214) target = $region16
        $region15: #{tpu_custom_call.1} parent=11 // pred_region
          %s218 = ssub.s32 1024, 1024
          %219 = vsyncadd [#allocation6], %s218
          %s220 = sshll.u32 [#allocation5], 4
          %s221 = int_to_ptr.vmem [resolvable:$true] %s220
          %226 = dma.hbm_to_vmem [thread:$0]  %s1, 1024, %s221, [#allocation6], 64, 64, 4
        $region16: #{tpu_custom_call.1} parent=11 // pred_fallthru
          _
        // Predicated region
        $region17: #{tpu_custom_call.1} parent=11 // pred_check
          %p227 = pneg %p89
        $region18: #{tpu_custom_call.1} parent=11 // pred_check_branch
          %229 = sbr.rel (%p227) target = $region20
        $region19: #{tpu_custom_call.1} parent=11 // pred_region
          _
        $region20: #{tpu_custom_call.1} parent=11 // pred_fallthru
          _
        // Predicated region
        $region21: #{tpu_custom_call.1} parent=11 // pred_check
          %p230 = pneg %p110
        $region22: #{tpu_custom_call.1} parent=11 // pred_check_branch
          %232 = sbr.rel (%p230) target = $region24
        $region23: #{tpu_custom_call.1} parent=11 // pred_region
          %s234 = ssub.s32 1024, 1024
          %235 = vsyncadd [#allocation6], %s234
          %s236 = sshll.u32 [#allocation7], 4
          %s237 = int_to_ptr.vmem [resolvable:$true] %s236
          %242 = dma.hbm_to_vmem [thread:$0]  %s3, 1024, %s237, [#allocation6], 64, 64, 4
        $region24: #{tpu_custom_call.1} parent=11 // pred_fallthru
          _
        // Predicated region
        $region25: #{tpu_custom_call.1} parent=11 // pred_check
          %p243 = pneg %p131
        $region26: #{tpu_custom_call.1} parent=11 // pred_check_branch
          %245 = sbr.rel (%p243) target = $region28
        $region27: #{tpu_custom_call.1} parent=11 // pred_region
          _
        $region28: #{tpu_custom_call.1} parent=11 // pred_fallthru
          _
        // Predicated region
        $region29: #{tpu_custom_call.1} parent=11 // pred_check
          %p246 = pneg %p152
        $region30: #{tpu_custom_call.1} parent=11 // pred_check_branch
          %248 = sbr.rel (%p246) target = $region32
        $region31: #{tpu_custom_call.1} parent=11 // pred_region
          %s250 = ssub.s32 1024, 1024
          %251 = vsyncadd [#allocation9], %s250
          %s252 = sshll.u32 [#allocation8], 4
          %s253 = int_to_ptr.vmem [resolvable:$true] %s252
          %258 = dma.hbm_to_vmem [thread:$0]  %s5, 1024, %s253, [#allocation9], 64, 64, 4
        $region32: #{tpu_custom_call.1} parent=11 // pred_fallthru
          _
        // Predicated region
        $region33: #{tpu_custom_call.1} parent=11 // pred_check
          %p259 = pneg %p173
        $region34: #{tpu_custom_call.1} parent=11 // pred_check_branch
          %261 = sbr.rel (%p259) target = $region36
        $region35: #{tpu_custom_call.1} parent=11 // pred_region
          _
        $region36: #{tpu_custom_call.1} parent=11 // pred_fallthru
          _
      $region12: #{tpu_custom_call.1} parent=5 // pred_fallthru
        _
      %p262 = scmp.lt.s32.totalorder %s21, 2
      // Predicated region
      $region37: #{tpu_custom_call.1} parent=5 // pred_check
        %p263 = pneg %p262
      $region38: #{tpu_custom_call.1} parent=5 // pred_check_branch
        %265 = sbr.rel (%p263) target = $region40
      $region39: #{tpu_custom_call.1} parent=5 // pred_region
        // Predicated region
        $region41: #{tpu_custom_call.1} parent=39 // pred_check
          %p266 = pneg %p41
        $region42: #{tpu_custom_call.1} parent=39 // pred_check_branch
          %268 = sbr.rel (%p266) target = $region44
        $region43: #{tpu_custom_call.1} parent=39 // pred_region
          %s269 = sand.u32 %s31, 1
          %s270 = scalar_lea.sflag [#allocation3], %s269
          %s271 = sand.u32 %s31, 1
          %s272 = smul.addr %s271, 32
          %s273 = scalar_lea.vmem [#allocation2], %s272
          %s274 = smul.u32 4, %s21
          %s276 = ssub.s32 512, 512
          %277 = vsyncadd %s270, %s276
          %s278 = smul.addr %s274, 128
          %s279 = scalar_lea.hbm %s0, %s278
          %s280 = sshll.u32 %s273, 4
          %s281 = int_to_ptr.vmem [resolvable:$true] %s280
          %286 = dma.hbm_to_vmem [thread:$0]  %s279, 512, %s281, %s270, 128, 128, 8
        $region44: #{tpu_custom_call.1} parent=39 // pred_fallthru
          _
      $region40: #{tpu_custom_call.1} parent=5 // pred_fallthru
        _
      %p287 = scmp.le.s32.totalorder 1, %s21
      %p288 = scmp.lt.s32.totalorder %s21, 3
      %p289 = pnand %p287, %p288
      %p290 = pneg %p289
      // Predicated region
      $region45: #{tpu_custom_call.1} parent=5 // pred_check
        _
      $region46: #{tpu_custom_call.1} parent=5 // pred_check_branch
        %292 = sbr.rel (%p289) target = $region48
      $region47: #{tpu_custom_call.1} parent=5 // pred_region
        %s293 = ssub.s32 %s21, 1
        %s294 = sand.u32 %s34, 1
        %s295 = scalar_lea.sflag [#allocation3], %s294
        %s296 = sand.u32 %s34, 1
        %s297 = smul.addr %s296, 32
        %s298 = scalar_lea.vmem [#allocation2], %s297
        // Predicated region
        $region49: #{tpu_custom_call.1} parent=47 // pred_check
          %p299 = pneg %p47
        $region50: #{tpu_custom_call.1} parent=47 // pred_check_branch
          %301 = sbr.rel (%p299) target = $region52
        $region51: #{tpu_custom_call.1} parent=47 // pred_region
          %302 = dma.done %s295, 512
        $region52: #{tpu_custom_call.1} parent=47 // pred_fallthru
          _
        // Predicated region
        $region53: #{tpu_custom_call.1} parent=47 // pred_check
          %p303 = pneg %p68
        $region54: #{tpu_custom_call.1} parent=47 // pred_check_branch
          %305 = sbr.rel (%p303) target = $region56
        $region55: #{tpu_custom_call.1} parent=47 // pred_region
          %306 = dma.done [#allocation6], 1024
        $region56: #{tpu_custom_call.1} parent=47 // pred_fallthru
          _
        // Predicated region
        $region57: #{tpu_custom_call.1} parent=47 // pred_check
          %p307 = pneg %p110
        $region58: #{tpu_custom_call.1} parent=47 // pred_check_branch
          %309 = sbr.rel (%p307) target = $region60
        $region59: #{tpu_custom_call.1} parent=47 // pred_region
          %310 = dma.done [#allocation6], 1024
        $region60: #{tpu_custom_call.1} parent=47 // pred_fallthru
          _
        // Predicated region
        $region61: #{tpu_custom_call.1} parent=47 // pred_check
          %p311 = pneg %p152
        $region62: #{tpu_custom_call.1} parent=47 // pred_check_branch
          %313 = sbr.rel (%p311) target = $region64
        $region63: #{tpu_custom_call.1} parent=47 // pred_region
          %314 = dma.done [#allocation9], 1024
        $region64: #{tpu_custom_call.1} parent=47 // pred_fallthru
          _
        %s315 = sand.u32 %s34, 1
        %s316 = scalar_lea.sflag [#allocation3], %s315
        %s317 = sand.u32 %s34, 1
        %s318 = smul.addr %s317, 32
        %s319 = scalar_lea.vmem [#allocation2], %s318
        %p320 = pneg %p47
        %p321 = pneg %p44
        %p322 = pneg %p68
        %p323 = pneg %p65
        %p324 = pneg %p89
        %p325 = pneg %p86
        %p326 = pneg %p110
        %p327 = pneg %p107
        %p328 = pneg %p131
        %p329 = pneg %p128
        %p330 = pneg %p152
        %p331 = pneg %p149
        %p332 = pneg %p173
        %p333 = pneg %p170
        %p334 = pneg %p199
        %p335 = pneg %p196
        %s336 = sand.u32 %s186, 1
        %s337 = scalar_lea.sflag [#allocation4], %s336
        %s338 = sand.u32 %s186, 1
        %s339 = smul.addr %s338, 32
        %s340 = scalar_lea.vmem [#allocation10], %s339
        %s341 = smul.u32 4, %s26
        %s342 = smul.u32 4, %s26
        %v344 = vld [vmem:[%s298] sm:$0xff]
        %v345 = vld [vmem:[%s298 + $0x8] sm:$0xff]
        %v346 = vld [vmem:[%s298 + $0x10] sm:$0xff]
        %v347 = vld [vmem:[%s298 + $0x18] sm:$0xff]
        %v348 = vld [vmem:[#allocation5] sm:$0xf]
        %v349 = vld [vmem:[#allocation5 + $0x4] sm:$0xf]
        %v350 = vld [vmem:[#allocation5 + $0x8] sm:$0xf]
        %v351 = vld [vmem:[#allocation5 + $0xc] sm:$0xf]
        %v352 = vld [vmem:[#allocation5 + $0x10] sm:$0xf]
        %v353 = vld [vmem:[#allocation5 + $0x14] sm:$0xf]
        %v354 = vld [vmem:[#allocation5 + $0x18] sm:$0xf]
        %v355 = vld [vmem:[#allocation5 + $0x1c] sm:$0xf]
        %v356 = vld [vmem:[#allocation5 + $0x20] sm:$0xf]
        %v357 = vld [vmem:[#allocation5 + $0x24] sm:$0xf]
        %v358 = vld [vmem:[#allocation5 + $0x28] sm:$0xf]
        %v359 = vld [vmem:[#allocation5 + $0x2c] sm:$0xf]
        %v360 = vld [vmem:[#allocation5 + $0x30] sm:$0xf]
        %v361 = vld [vmem:[#allocation5 + $0x34] sm:$0xf]
        %v362 = vld [vmem:[#allocation5 + $0x38] sm:$0xf]
        %v363 = vld [vmem:[#allocation5 + $0x3c] sm:$0xf]
        %v364 = vld [vmem:[%s2] sm:$0x1]
        %v365 = vpack.c.bf16 %v345, %v344
        %v366 = vpack.c.bf16 %v347, %v346
        %v368 = vlaneseq
        %v369 = vshrl.u32 %v368, 7
        %v370 = vsub.s32 0, %v369
        %v371 = vrot.slane %v364, %v370
        %v389 = vunpack.c.l.b16 %v348
        %v390 = vunpack.c.l.b16 %v349
        %v391 = vunpack.c.l.b16 %v350
        %v392 = vunpack.c.l.b16 %v351
        %v393 = vunpack.c.l.b16 %v352
        %v394 = vunpack.c.l.b16 %v353
        %v395 = vunpack.c.l.b16 %v354
        %v396 = vunpack.c.l.b16 %v355
        %v397 = vunpack.c.l.b16 %v356
        %v398 = vunpack.c.l.b16 %v357
        %v399 = vunpack.c.l.b16 %v358
        %v400 = vunpack.c.l.b16 %v359
        %v401 = vunpack.c.l.b16 %v360
        %v402 = vunpack.c.l.b16 %v361
        %v403 = vunpack.c.l.b16 %v362
        %v404 = vunpack.c.l.b16 %v363
        %v405 = vpack.c.b16 %v390, %v389
        %v406 = vpack.c.b16 %v392, %v391
        %v407 = vpack.c.b16 %v394, %v393
        %v408 = vpack.c.b16 %v396, %v395
        %v409 = vpack.c.b16 %v398, %v397
        %v410 = vpack.c.b16 %v400, %v399
        %v411 = vpack.c.b16 %v402, %v401
        %v412 = vpack.c.b16 %v404, %v403
        %421 = vmatprep.subr.bf16.mxu0 0
        %422 = vmatpush1.bf16.msra.mxu0 %v405
        %423 = vmatprep.subr.bf16.mxu0 0
        %424 = vmatpush1.bf16.msra.mxu0 %v406
        %425 = vmatprep.subr.bf16.mxu0 0
        %426 = vmatpush1.bf16.msra.mxu0 %v407
        %427 = vmatprep.subr.bf16.mxu0 0
        %428 = vmatpush1.bf16.msra.mxu0 %v408
        %429 = vmatprep.subr.bf16.mxu0 0
        %430 = vmatpush1.bf16.msra.mxu0 %v409
        %431 = vmatprep.subr.bf16.mxu0 0
        %432 = vmatpush1.bf16.msra.mxu0 %v410
        %433 = vmatprep.subr.bf16.mxu0 0
        %434 = vmatpush1.bf16.msra.mxu0 %v411
        %435 = vmatprep.subr.bf16.mxu0 0
        %436 = vmatpush1.bf16.msra.mxu0 %v412
        %437 = vmatprep.subr.bf16.mxu0 0
        %438 = vmatpush1.bf16.msra.mxu0 0
        %439 = vmatprep.subr.bf16.mxu0 0
        %440 = vmatpush1.bf16.msra.mxu0 0
        %441 = vmatprep.subr.bf16.mxu0 0
        %442 = vmatpush1.bf16.msra.mxu0 0
        %443 = vmatprep.subr.bf16.mxu0 0
        %444 = vmatpush1.bf16.msra.mxu0 0
        %445 = vmatprep.subr.bf16.mxu0 0
        %446 = vmatpush1.bf16.msra.mxu0 0
        %447 = vmatprep.subr.bf16.mxu0 0
        %448 = vmatpush1.bf16.msra.mxu0 0
        %449 = vmatprep.subr.bf16.mxu0 0
        %450 = vmatpush1.bf16.msra.mxu0 0
        %451 = vmatprep.subr.bf16.mxu0 0
        %452 = vmatpush1.bf16.msra.mxu0 0
        %453 = vmatprep.mubr.bf16.mxu0 0
        %454 = vmatmul.mubr.bf16.gmra.mrb[0].mxu0 %v365
        %v455 = vpop.f32.mrb[0].mxu0
        %v456 = vadd.f32 %v371, %v455
        %v457 = vpop.f32.mrb[0].mxu0
        %v458 = vpop.f32.mrb[0].mxu0
        %v459 = vadd.f32 %v371, %v458
        %v460 = vpop.f32.mrb[0].mxu0
        %461 = vmatprep.mubr.bf16.mxu0 0
        %462 = vmatmul.mubr.bf16.gmra.mrb[0].mxu0 %v366
        %v463 = vpop.f32.mrb[0].mxu0
        %v464 = vadd.f32 %v371, %v463
        %v465 = vpop.f32.mrb[0].mxu0
        %v466 = vpop.f32.mrb[0].mxu0
        %v467 = vadd.f32 %v371, %v466
        %v468 = vpop.f32.mrb[0].mxu0
        %469 = vdwg.mxu0
        %v470 = vmax.f32 %v456, 0.0
        %v471 = vmax.f32 %v459, 0.0
        %v472 = vmax.f32 %v464, 0.0
        %v473 = vmax.f32 %v467, 0.0
        %v474 = vld [vmem:[#allocation7] sm:$0xf]
        %v475 = vld [vmem:[#allocation7 + $0x4] sm:$0xf]
        %v476 = vld [vmem:[#allocation7 + $0x8] sm:$0xf]
        %v477 = vld [vmem:[#allocation7 + $0xc] sm:$0xf]
        %v478 = vld [vmem:[#allocation7 + $0x10] sm:$0xf]
        %v479 = vld [vmem:[#allocation7 + $0x14] sm:$0xf]
        %v480 = vld [vmem:[#allocation7 + $0x18] sm:$0xf]
        %v481 = vld [vmem:[#allocation7 + $0x1c] sm:$0xf]
        %v482 = vld [vmem:[#allocation7 + $0x20] sm:$0xf]
        %v483 = vld [vmem:[#allocation7 + $0x24] sm:$0xf]
        %v484 = vld [vmem:[#allocation7 + $0x28] sm:$0xf]
        %v485 = vld [vmem:[#allocation7 + $0x2c] sm:$0xf]
        %v486 = vld [vmem:[#allocation7 + $0x30] sm:$0xf]
        %v487 = vld [vmem:[#allocation7 + $0x34] sm:$0xf]
        %v488 = vld [vmem:[#allocation7 + $0x38] sm:$0xf]
        %v489 = vld [vmem:[#allocation7 + $0x3c] sm:$0xf]
        %v490 = vld [vmem:[%s4] sm:$0x1]
        %v491 = vpack.c.bf16 %v471, %v470
        %v492 = vpack.c.bf16 %v473, %v472
        %v494 = vlaneseq
        %v495 = vshrl.u32 %v494, 7
        %v496 = vsub.s32 0, %v495
        %v497 = vrot.slane %v490, %v496
        %v515 = vunpack.c.l.b16 %v474
        %v516 = vunpack.c.l.b16 %v475
        %v517 = vunpack.c.l.b16 %v476
        %v518 = vunpack.c.l.b16 %v477
        %v519 = vunpack.c.l.b16 %v478
        %v520 = vunpack.c.l.b16 %v479
        %v521 = vunpack.c.l.b16 %v480
        %v522 = vunpack.c.l.b16 %v481
        %v523 = vunpack.c.l.b16 %v482
        %v524 = vunpack.c.l.b16 %v483
        %v525 = vunpack.c.l.b16 %v484
        %v526 = vunpack.c.l.b16 %v485
        %v527 = vunpack.c.l.b16 %v486
        %v528 = vunpack.c.l.b16 %v487
        %v529 = vunpack.c.l.b16 %v488
        %v530 = vunpack.c.l.b16 %v489
        %v531 = vpack.c.b16 %v516, %v515
        %v532 = vpack.c.b16 %v518, %v517
        %v533 = vpack.c.b16 %v520, %v519
        %v534 = vpack.c.b16 %v522, %v521
        %v535 = vpack.c.b16 %v524, %v523
        %v536 = vpack.c.b16 %v526, %v525
        %v537 = vpack.c.b16 %v528, %v527
        %v538 = vpack.c.b16 %v530, %v529
        %547 = vmatprep.subr.bf16.mxu0 0
        %548 = vmatpush1.bf16.msra.mxu0 %v531
        %549 = vmatprep.subr.bf16.mxu0 0
        %550 = vmatpush1.bf16.msra.mxu0 %v532
        %551 = vmatprep.subr.bf16.mxu0 0
        %552 = vmatpush1.bf16.msra.mxu0 %v533
        %553 = vmatprep.subr.bf16.mxu0 0
        %554 = vmatpush1.bf16.msra.mxu0 %v534
        %555 = vmatprep.subr.bf16.mxu0 0
        %556 = vmatpush1.bf16.msra.mxu0 %v535
        %557 = vmatprep.subr.bf16.mxu0 0
        %558 = vmatpush1.bf16.msra.mxu0 %v536
        %559 = vmatprep.subr.bf16.mxu0 0
        %560 = vmatpush1.bf16.msra.mxu0 %v537
        %561 = vmatprep.subr.bf16.mxu0 0
        %562 = vmatpush1.bf16.msra.mxu0 %v538
        %563 = vmatprep.subr.bf16.mxu0 0
        %564 = vmatpush1.bf16.msra.mxu0 0
        %565 = vmatprep.subr.bf16.mxu0 0
        %566 = vmatpush1.bf16.msra.mxu0 0
        %567 = vmatprep.subr.bf16.mxu0 0
        %568 = vmatpush1.bf16.msra.mxu0 0
        %569 = vmatprep.subr.bf16.mxu0 0
        %570 = vmatpush1.bf16.msra.mxu0 0
        %571 = vmatprep.subr.bf16.mxu0 0
        %572 = vmatpush1.bf16.msra.mxu0 0
        %573 = vmatprep.subr.bf16.mxu0 0
        %574 = vmatpush1.bf16.msra.mxu0 0
        %575 = vmatprep.subr.bf16.mxu0 0
        %576 = vmatpush1.bf16.msra.mxu0 0
        %577 = vmatprep.subr.bf16.mxu0 0
        %578 = vmatpush1.bf16.msra.mxu0 0
        %579 = vmatprep.mubr.bf16.mxu0 0
        %580 = vmatmul.mubr.bf16.gmra.mrb[0].mxu0 %v491
        %v581 = vpop.f32.mrb[0].mxu0
        %v582 = vadd.f32 %v497, %v581
        %v583 = vpop.f32.mrb[0].mxu0
        %v584 = vpop.f32.mrb[0].mxu0
        %v585 = vadd.f32 %v497, %v584
        %v586 = vpop.f32.mrb[0].mxu0
        %587 = vmatprep.mubr.bf16.mxu0 0
        %588 = vmatmul.mubr.bf16.gmra.mrb[0].mxu0 %v492
        %v589 = vpop.f32.mrb[0].mxu0
        %v590 = vadd.f32 %v497, %v589
        %v591 = vpop.f32.mrb[0].mxu0
        %v592 = vpop.f32.mrb[0].mxu0
        %v593 = vadd.f32 %v497, %v592
        %v594 = vpop.f32.mrb[0].mxu0
        %595 = vdwg.mxu0
        %v596 = vmax.f32 %v582, 0.0
        %v597 = vmax.f32 %v585, 0.0
        %v598 = vmax.f32 %v590, 0.0
        %v599 = vmax.f32 %v593, 0.0
        %v600 = vld [vmem:[#allocation8] sm:$0xf]
        %v601 = vld [vmem:[#allocation8 + $0x4] sm:$0xf]
        %v602 = vld [vmem:[#allocation8 + $0x8] sm:$0xf]
        %v603 = vld [vmem:[#allocation8 + $0xc] sm:$0xf]
        %v604 = vld [vmem:[#allocation8 + $0x10] sm:$0xf]
        %v605 = vld [vmem:[#allocation8 + $0x14] sm:$0xf]
        %v606 = vld [vmem:[#allocation8 + $0x18] sm:$0xf]
        %v607 = vld [vmem:[#allocation8 + $0x1c] sm:$0xf]
        %v608 = vld [vmem:[#allocation8 + $0x20] sm:$0xf]
        %v609 = vld [vmem:[#allocation8 + $0x24] sm:$0xf]
        %v610 = vld [vmem:[#allocation8 + $0x28] sm:$0xf]
        %v611 = vld [vmem:[#allocation8 + $0x2c] sm:$0xf]
        %v612 = vld [vmem:[#allocation8 + $0x30] sm:$0xf]
        %v613 = vld [vmem:[#allocation8 + $0x34] sm:$0xf]
        %v614 = vld [vmem:[#allocation8 + $0x38] sm:$0xf]
        %v615 = vld [vmem:[#allocation8 + $0x3c] sm:$0xf]
        %v616 = vld [vmem:[%s6] sm:$0x1]
        %v617 = vpack.c.bf16 %v597, %v596
        %v618 = vpack.c.bf16 %v599, %v598
        %v620 = vlaneseq
        %v621 = vshrl.u32 %v620, 7
        %v622 = vsub.s32 0, %v621
        %v623 = vrot.slane %v616, %v622
        %v641 = vunpack.c.l.b16 %v600
        %v642 = vunpack.c.l.b16 %v601
        %v643 = vunpack.c.l.b16 %v602
        %v644 = vunpack.c.l.b16 %v603
        %v645 = vunpack.c.l.b16 %v604
        %v646 = vunpack.c.l.b16 %v605
        %v647 = vunpack.c.l.b16 %v606
        %v648 = vunpack.c.l.b16 %v607
        %v649 = vunpack.c.l.b16 %v608
        %v650 = vunpack.c.l.b16 %v609
        %v651 = vunpack.c.l.b16 %v610
        %v652 = vunpack.c.l.b16 %v611
        %v653 = vunpack.c.l.b16 %v612
        %v654 = vunpack.c.l.b16 %v613
        %v655 = vunpack.c.l.b16 %v614
        %v656 = vunpack.c.l.b16 %v615
        %v657 = vpack.c.b16 %v642, %v641
        %v658 = vpack.c.b16 %v644, %v643
        %v659 = vpack.c.b16 %v646, %v645
        %v660 = vpack.c.b16 %v648, %v647
        %v661 = vpack.c.b16 %v650, %v649
        %v662 = vpack.c.b16 %v652, %v651
        %v663 = vpack.c.b16 %v654, %v653
        %v664 = vpack.c.b16 %v656, %v655
        %673 = vmatprep.subr.bf16.mxu0 0
        %674 = vmatpush1.bf16.msra.mxu0 %v657
        %675 = vmatprep.subr.bf16.mxu0 0
        %676 = vmatpush1.bf16.msra.mxu0 %v658
        %677 = vmatprep.subr.bf16.mxu0 0
        %678 = vmatpush1.bf16.msra.mxu0 %v659
        %679 = vmatprep.subr.bf16.mxu0 0
        %680 = vmatpush1.bf16.msra.mxu0 %v660
        %681 = vmatprep.subr.bf16.mxu0 0
        %682 = vmatpush1.bf16.msra.mxu0 %v661
        %683 = vmatprep.subr.bf16.mxu0 0
        %684 = vmatpush1.bf16.msra.mxu0 %v662
        %685 = vmatprep.subr.bf16.mxu0 0
        %686 = vmatpush1.bf16.msra.mxu0 %v663
        %687 = vmatprep.subr.bf16.mxu0 0
        %688 = vmatpush1.bf16.msra.mxu0 %v664
        %689 = vmatprep.subr.bf16.mxu0 0
        %690 = vmatpush1.bf16.msra.mxu0 0
        %691 = vmatprep.subr.bf16.mxu0 0
        %692 = vmatpush1.bf16.msra.mxu0 0
        %693 = vmatprep.subr.bf16.mxu0 0
        %694 = vmatpush1.bf16.msra.mxu0 0
        %695 = vmatprep.subr.bf16.mxu0 0
        %696 = vmatpush1.bf16.msra.mxu0 0
        %697 = vmatprep.subr.bf16.mxu0 0
        %698 = vmatpush1.bf16.msra.mxu0 0
        %699 = vmatprep.subr.bf16.mxu0 0
        %700 = vmatpush1.bf16.msra.mxu0 0
        %701 = vmatprep.subr.bf16.mxu0 0
        %702 = vmatpush1.bf16.msra.mxu0 0
        %703 = vmatprep.subr.bf16.mxu0 0
        %704 = vmatpush1.bf16.msra.mxu0 0
        %705 = vmatprep.mubr.bf16.mxu0 0
        %706 = vmatmul.mubr.bf16.gmra.mrb[0].mxu0 %v617
        %v707 = vpop.f32.mrb[0].mxu0
        %v708 = vadd.f32 %v623, %v707
        %v709 = vpop.f32.mrb[0].mxu0
        %v710 = vpop.f32.mrb[0].mxu0
        %v711 = vadd.f32 %v623, %v710
        %v712 = vpop.f32.mrb[0].mxu0
        %713 = vmatprep.mubr.bf16.mxu0 0
        %714 = vmatmul.mubr.bf16.gmra.mrb[0].mxu0 %v618
        %v715 = vpop.f32.mrb[0].mxu0
        %v716 = vadd.f32 %v623, %v715
        %v717 = vpop.f32.mrb[0].mxu0
        %v718 = vpop.f32.mrb[0].mxu0
        %v719 = vadd.f32 %v623, %v718
        %v720 = vpop.f32.mrb[0].mxu0
        %721 = vdwg.mxu0
        %722 = vst [vmem:[%s340] sm:$0xff] %v708
        %723 = vst [vmem:[%s340 + $0x8] sm:$0xff] %v711
        %724 = vst [vmem:[%s340 + $0x10] sm:$0xff] %v716
        %725 = vst [vmem:[%s340 + $0x18] sm:$0xff] %v719
        %s726 = sand.u32 %s186, 1
        %s727 = scalar_lea.sflag [#allocation4], %s726
        %s728 = sand.u32 %s186, 1
        %s729 = smul.addr %s728, 32
        %s730 = scalar_lea.vmem [#allocation10], %s729
        // Predicated region
        $region65: #{tpu_custom_call.1} parent=47 // pred_check
          %p731 = pneg %p196
        $region66: #{tpu_custom_call.1} parent=47 // pred_check_branch
          %733 = sbr.rel (%p731) target = $region68
        $region67: #{tpu_custom_call.1} parent=47 // pred_region
          %s734 = smul.u32 4, %s26
          %s736 = ssub.s32 512, 512
          %737 = vsyncadd %s727, %s736
          %s738 = smul.addr %s734, 128
          %s739 = scalar_lea.hbm %s7, %s738
          %s740 = sshll.u32 %s730, 4
          %s741 = int_to_ptr.vmem [resolvable:$true] %s740
          %746 = dma.vmem_to_hbm [thread:$0]  %s741, 512, %s739, %s727, 128, 128, 8
        $region68: #{tpu_custom_call.1} parent=47 // pred_fallthru
          _
      $region48: #{tpu_custom_call.1} parent=5 // pred_fallthru
        _
      %p747 = scmp.le.s32.totalorder 2, %s21
      // Predicated region
      $region69: #{tpu_custom_call.1} parent=5 // pred_check
        %p748 = pneg %p747
      $region70: #{tpu_custom_call.1} parent=5 // pred_check_branch
        %750 = sbr.rel (%p748) target = $region72
      $region71: #{tpu_custom_call.1} parent=5 // pred_region
        %s751 = ssub.s32 %s21, 2
        // Predicated region
        $region73: #{tpu_custom_call.1} parent=71 // pred_check
          %p752 = pneg %p202
        $region74: #{tpu_custom_call.1} parent=71 // pred_check_branch
          %754 = sbr.rel (%p752) target = $region76
        $region75: #{tpu_custom_call.1} parent=71 // pred_region
          %s755 = sand.u32 %s187, 1
          %s756 = scalar_lea.sflag [#allocation4], %s755
          %s757 = sand.u32 %s187, 1
          %s758 = smul.addr %s757, 32
          %s759 = scalar_lea.vmem [#allocation10], %s758
          %760 = dma.done %s756, 512
        $region76: #{tpu_custom_call.1} parent=71 // pred_fallthru
          _
      $region72: #{tpu_custom_call.1} parent=5 // pred_fallthru
        _
    $region6: #{tpu_custom_call.1} parent=1 // loop_footer
      %s25 = sadd.s32 1, %s21
    $region7: #{tpu_custom_call.1} parent=1 // loop_footer_branch
      %20 = sbr.rel target = $region3
    $region8: #{tpu_custom_call.1} parent=1 // loop_exit
      _
    %761 = vsyncpa [#allocation3], 1
    %s762 = scalar_lea.sflag [#allocation3], 1
    %763 = vsyncpa %s762, 1
    %764 = vsyncpa [#allocation6], 1
    %765 = vsyncpa [#allocation9], 1
    %766 = vsyncpa [#allocation4], 1
    %s767 = scalar_lea.sflag [#allocation4], 1
    %768 = vsyncpa %s767, 1

</llo_original>
